<compile_context>
chip_gen: v7x
topology: tpu7x:2x2x1
jax: 0.10.0
libtpu: 0.0.40
codegen_flags: <defaults>
</compile_context>

<pallas_src>
import functools
import math

import jax
import jax.numpy as jnp
from jax.experimental import pallas as pl
from jax.experimental.pallas import tpu as pltpu

NEG_INF = -1e20  # ParlAI's neginf() for float32 / bf16


def _mha_kernel(n_heads, dim_per_head, neg_inf, with_dot, approx_recip, *refs):
    (q_ref, k_ref, v_ref, mask_ref,
     wqt_ref, bq_ref, wkt_ref, bk_ref,
     wvt_ref, bv_ref, wot_ref, bo_ref) = refs[:12]
    if with_dot:
        out_ref, dot_ref, kproj_ref, vproj_ref = refs[12:16]
        k_sc, v_sc, mask_sc = refs[16:]
    else:
        out_ref, kproj_ref, vproj_ref = refs[12:15]
        dot_ref = None
        k_sc, v_sc, mask_sc = refs[15:]

    H, dph = n_heads, dim_per_head
    qi = pl.program_id(1)
    cdt = wqt_ref.dtype          # MXU operand dtype (bf16 or f32), set by wrapper

    def split_heads(x):
        # (L, H*dph) -> (H, L, dph): one reshape + one layout-aware transpose
        # (no per-head lane-slice concatenate, no per-head matmul downstream).
        L = x.shape[0]
        return pltpu.einshape("lhd->hld", x.reshape(L, H, dph))

    # ---- Once per batch element (qi == 0): project K/V, cache head-major in
    # VMEM scratch, write prev_key / prev_value, build the additive mask row.
    @pl.when(qi == 0)
    def _():
        xk = k_ref[0].astype(cdt)                                 # (Lk, D)
        xv = v_ref[0].astype(cdt)
        K = jnp.dot(xk, wkt_ref[...],
                    preferred_element_type=jnp.float32) + bk_ref[...]
        V = jnp.dot(xv, wvt_ref[...],
                    preferred_element_type=jnp.float32) + bv_ref[...]
        Kh = split_heads(K)                                       # (H, Lk, dph)
        Vh = split_heads(V)
        k_sc[...] = Kh.astype(k_sc.dtype)
        v_sc[...] = Vh.astype(v_sc.dtype)
        kproj_ref[0] = Kh.astype(kproj_ref.dtype)
        vproj_ref[0] = Vh.astype(vproj_ref.dtype)
        # Additive mask: 0 where attending, NEG_INF where blocked.
        mask_sc[...] = jnp.where(mask_ref[0] == 0,
                                 jnp.float32(neg_inf), jnp.float32(0.0))

    # ---- Per-query-tile work.  1/sqrt(dph) is folded into wqt / bq.
    xq = q_ref[0].astype(cdt)                                     # (tq, D)
    tq = xq.shape[0]

    Q = jnp.dot(xq, wqt_ref[...],
                preferred_element_type=jnp.float32) + bq_ref[...]
    Qh = split_heads(Q).astype(cdt)                               # (H, tq, dph)

    # Head-batched logits: one batched MXU matmul for all heads.
    dot = jnp.einsum('hqd,hkd->hqk', Qh, k_sc[...],
                     preferred_element_type=jnp.float32)          # (H, tq, Lk)
    dot = dot + mask_sc[...]                                      # broadcast (1, Lk)
    if with_dot:
        dot_ref[0] = dot.astype(dot_ref.dtype)

    # Softmax over keys in f32.
    m = jnp.max(dot, axis=-1, keepdims=True)
    e = jnp.exp(dot - m)
    p = e * pl.reciprocal(jnp.sum(e, axis=-1, keepdims=True), approx=approx_recip)
    # TODO(synk): attn_dropout is identity (p=0 / eval mode), so omitted.

    att = jnp.einsum('hqk,hkd->hqd', p.astype(cdt), v_sc[...],
                     preferred_element_type=jnp.float32)          # (H, tq, dph)

    # Output projection: re-interleave heads to (tq, D) and do ONE D-deep
    # matmul (instead of H shallow dph-deep matmuls + live accumulator).
    att_i = pltpu.einshape("hqd->qhd", att).reshape(tq, H * dph).astype(cdt)
    out = jnp.dot(att_i, wot_ref[...],
                  preferred_element_type=jnp.float32) + bo_ref[...]
    out_ref[0] = out.astype(out_ref.dtype)


def _padded_bytes(shape, dtype):
    """Rough (8,128)-tile-padded VMEM footprint of one buffer."""
    itemsize = jnp.dtype(dtype).itemsize
    if len(shape) == 1:
        return -(-int(shape[0]) // 128) * 128 * itemsize
    lead = 1
    for s in shape[:-2]:
        lead *= int(s)
    sub = -(-int(shape[-2]) // 8) * 8
    lane = -(-int(shape[-1]) // 128) * 128
    return lead * sub * lane * itemsize


def _vmem_capacity_bytes():
    try:
        return int(pltpu.get_tpu_info().vmem_capacity_bytes)
    except Exception:
        return 64 << 20   # conservative (v7x per-TC) fallback


def _vmem_limit_bytes(tq, Lk, D, n_heads, dph, in_dtype, compute_dtype,
                      with_dot, dot_dtype):
    total = 0
    # double-buffered streamed blocks
    dbl = [((1, tq, D), in_dtype), ((1, Lk, D), in_dtype), ((1, Lk, D), in_dtype),
           ((1, 1, Lk), jnp.int32), ((1, tq, D), in_dtype),
           ((1, n_heads, Lk, dph), in_dtype), ((1, n_heads, Lk, dph), in_dtype)]
    if with_dot:
        dbl.append(((1, n_heads, tq, Lk), dot_dtype))
    for shp, dt in dbl:
        total += 2 * _padded_bytes(shp, dt)
    # single-buffered (Buffered(1)) resident weights + f32 biases
    for _ in range(4):
        total += _padded_bytes((D, D), compute_dtype) + _padded_bytes((1, D), jnp.float32)
    # VMEM scratch: K/V head-major + additive mask row
    total += 2 * _padded_bytes((n_heads, Lk, dph), compute_dtype)
    total += _padded_bytes((1, Lk), jnp.float32)
    # headroom for compiler temporaries / relayouts
    total = int(total * 1.5) + (4 << 20)
    cap = _vmem_capacity_bytes()
    return int(max(16 << 20, min(total, cap - (8 << 20))))


def multi_head_attention(query, key, value, mask_bool, params, n_heads,
                         q_block=None, compute_dtype=None,
                         return_dot_prod=True, dot_prod_dtype=None):
    """Returns (out, new_incr_state, dot_prod) like the PyTorch module."""
    B, Lq, D = query.shape
    _, Lk, _ = key.shape
    assert D % n_heads == 0
    dph = D // n_heads
    wq, bq, wk, bk, wv, bv, wo, bo = params

    if compute_dtype is None:
        # bf16 inputs -> bf16 MXU operands; f32 inputs keep full precision.
        compute_dtype = jnp.bfloat16 if query.dtype == jnp.bfloat16 else jnp.float32
    compute_dtype = jnp.dtype(compute_dtype)
    is_f32_compute = (compute_dtype == jnp.dtype(jnp.float32))
    if dot_prod_dtype is None:
        dot_prod_dtype = query.dtype

    # Pre-transpose weights once on the host (torch Linear does x @ W.T), fold
    # the 1/sqrt(dph) scale into the Q projection, and cast to compute dtype.
    scale = math.sqrt(dph)
    wqt = (wq / scale).T.astype(compute_dtype)
    wkt = wk.T.astype(compute_dtype)
    wvt = wv.T.astype(compute_dtype)
    wot = wo.T.astype(compute_dtype)
    bqs = (bq / scale).astype(jnp.float32)
    bk32 = bk.astype(jnp.float32)
    bv32 = bv.astype(jnp.float32)
    bo32 = bo.astype(jnp.float32)

    # Query-tile size: device-aware default (v7x has 64 MiB VMEM/TC).
    if q_block is None:
        q_block = 128 if _vmem_capacity_bytes() <= (64 << 20) else 256
    tq = Lq if Lq <= q_block else q_block
    assert Lq % tq == 0, "Lq must be divisible by the query tile size"
    nq = Lq // tq

    mask_i32 = mask_bool.astype(jnp.int32).reshape(B, 1, Lk)

    kernel = functools.partial(_mha_kernel, n_heads, dph, NEG_INF,
                               return_dot_prod, not is_f32_compute)

    def w_spec(shape):
        # Constant index_map -> never re-DMA'd; single-buffer to halve VMEM.
        return pl.BlockSpec(shape, lambda b, qi: (0,) * len(shape),
                            pipeline_mode=pl.Buffered(1))

    in_specs = [
        pl.BlockSpec((1, tq, D), lambda b, qi: (b, qi, 0)),   # query tile
        pl.BlockSpec((1, Lk, D), lambda b, qi: (b, 0, 0)),    # key   (read at qi==0)
        pl.BlockSpec((1, Lk, D), lambda b, qi: (b, 0, 0)),    # value (read at qi==0)
        pl.BlockSpec((1, 1, Lk), lambda b, qi: (b, 0, 0)),    # mask
        w_spec((D, D)), w_spec((1, D)),                       # q_lin (scaled, transposed)
        w_spec((D, D)), w_spec((1, D)),                       # k_lin
        w_spec((D, D)), w_spec((1, D)),                       # v_lin
        w_spec((D, D)), w_spec((1, D)),                       # out_lin
    ]

    out_shapes = [jax.ShapeDtypeStruct((B, Lq, D), query.dtype)]
    out_specs = [pl.BlockSpec((1, tq, D), lambda b, qi: (b, qi, 0))]
    if return_dot_prod:
        out_shapes.append(jax.ShapeDtypeStruct((B, n_heads, Lq, Lk), dot_prod_dtype))
        out_specs.append(pl.BlockSpec((1, n_heads, tq, Lk),
                                      lambda b, qi: (b, 0, qi, 0)))
    out_shapes += [jax.ShapeDtypeStruct((B, n_heads, Lk, dph), query.dtype),
                   jax.ShapeDtypeStruct((B, n_heads, Lk, dph), query.dtype)]
    out_specs += [pl.BlockSpec((1, n_heads, Lk, dph), lambda b, qi: (b, 0, 0, 0)),
                  pl.BlockSpec((1, n_heads, Lk, dph), lambda b, qi: (b, 0, 0, 0))]

    scratch_shapes = [
        pltpu.VMEM((n_heads, Lk, dph), compute_dtype),   # projected K, head-major
        pltpu.VMEM((n_heads, Lk, dph), compute_dtype),   # projected V, head-major
        pltpu.VMEM((1, Lk), jnp.float32),                # additive mask row
    ]

    results = pl.pallas_call(
        kernel,
        out_shape=tuple(out_shapes),
        grid=(B, nq),
        in_specs=in_specs,
        out_specs=tuple(out_specs),
        scratch_shapes=scratch_shapes,
        compiler_params=pltpu.CompilerParams(
            # qi axis is "arbitrary": it carries K/V/mask scratch per batch elem.
            dimension_semantics=("parallel", "arbitrary"),
            vmem_limit_bytes=_vmem_limit_bytes(
                tq, Lk, D, n_heads, dph, query.dtype, compute_dtype,
                return_dot_prod, dot_prod_dtype)),
    )(query, key, value, mask_i32, wqt, bqs, wkt, bk32, wvt, bv32, wot, bo32)

    if return_dot_prod:
        out, dot, kproj, vproj = results
        dot_prod = dot.reshape(B * n_heads, Lq, Lk)
    else:
        out, kproj, vproj = results
        dot_prod = None

    new_incr_state = {
        "prev_key": kproj,       # already (B, H, Lk, dph) — written by the kernel
        "prev_value": vproj,
        "prev_mask": mask_bool,
    }
    # TODO(synk): incr_state reuse (prev_key concat / static_kv) and
    # [B, Lq, Lk] masks are handled by the caller, not this kernel.
    return out, new_incr_state, dot_prod


def _reference(query, key, value, mask_bool, params, n_heads):
    """Pure-JAX f32 reference mirroring the PyTorch forward (no incr_state)."""
    B, Lq, D = query.shape
    _, Lk, _ = key.shape
    dph = D // n_heads
    wq, bq, wk, bk, wv, bv, wo, bo = params

    def lin(x, w, b):
        return x @ w.T + b[0]

    def prep(t):
        return (t.reshape(B, -1, n_heads, dph)
                 .transpose(0, 2, 1, 3)
                 .reshape(B * n_heads, -1, dph))

    q = prep(lin(query, wq, bq)) / math.sqrt(dph)
    k = prep(lin(key, wk, bk))
    v = prep(lin(value, wv, bv))

    dot = jnp.einsum('bqd,bkd->bqk', q, k)
    attn_mask = jnp.broadcast_to((mask_bool == 0)[:, None, None, :],
                                 (B, n_heads, Lq, Lk)).reshape(B * n_heads, Lq, Lk)
    dot = jnp.where(attn_mask, NEG_INF, dot)
    w = jax.nn.softmax(dot.astype(jnp.float32), axis=-1).astype(query.dtype)
    att = jnp.einsum('bqk,bkd->bqd', w, v)
    att = att.reshape(B, n_heads, Lq, dph).transpose(0, 2, 1, 3).reshape(B, Lq, D)
    out = lin(att, wo, bo)
    prev_key = k.reshape(B, n_heads, Lk, dph)
    prev_value = v.reshape(B, n_heads, Lk, dph)
    return out, dot, prev_key, prev_value


def _run_case(seed, B, L, D, H, q_block, compute_dtype=None,
              return_dot_prod=True, rtol=1e-4, atol=1e-4, dot_atol=1e-3):
    ks = jax.random.split(seed, 12)
    std = math.sqrt(2.0 / (D + D))          # xavier_normal
    bnd = 1.0 / math.sqrt(D)
    wq = std * jax.random.normal(ks[0], (D, D), jnp.float32)
    wk = std * jax.random.normal(ks[1], (D, D), jnp.float32)
    wv = std * jax.random.normal(ks[2], (D, D), jnp.float32)
    wo = std * jax.random.normal(ks[3], (D, D), jnp.float32)
    bq = jax.random.uniform(ks[4], (1, D), jnp.float32, -bnd, bnd)
    bk = jax.random.uniform(ks[5], (1, D), jnp.float32, -bnd, bnd)
    bv = jax.random.uniform(ks[6], (1, D), jnp.float32, -bnd, bnd)
    bo = jax.random.uniform(ks[7], (1, D), jnp.float32, -bnd, bnd)
    params = (wq, bq, wk, bk, wv, bv, wo, bo)

    # Self-attention inputs; padding-style mask [B, key_len], True == attend.
    query = jax.random.normal(ks[8], (B, L, D), jnp.float32)
    lengths = jnp.clip(L - 2 * jnp.arange(B, dtype=jnp.int32), 1, L)
    mask_bool = (jnp.arange(L)[None, :] < lengths[:, None])

    out, new_incr_state, dot_prod = multi_head_attention(
        query, query, query, mask_bool, params, H, q_block=q_block,
        compute_dtype=compute_dtype, return_dot_prod=return_dot_prod)
    out = jax.block_until_ready(out)

    ref_out, ref_dot, ref_pk, ref_pv = _reference(
        query, query, query, mask_bool, params, H)
    assert jnp.allclose(out.astype(jnp.float32), ref_out,
                        rtol=rtol, atol=atol), "output mismatch"
    if return_dot_prod:
        dot_prod = jax.block_until_ready(dot_prod)
        assert jnp.allclose(dot_prod.astype(jnp.float32), ref_dot,
                            rtol=rtol, atol=dot_atol), "dot_prod mismatch"
    assert jnp.allclose(new_incr_state["prev_key"].astype(jnp.float32), ref_pk,
                        rtol=rtol, atol=atol), "prev_key mismatch"
    assert jnp.allclose(new_incr_state["prev_value"].astype(jnp.float32), ref_pv,
                        rtol=rtol, atol=atol), "prev_value mismatch"
    assert new_incr_state["prev_key"].shape == (B, H, L, D // H)
    assert new_incr_state["prev_value"].shape == (B, H, L, D // H)


if __name__ == "__main__":
    root = jax.random.PRNGKey(0)
    k1, k2, k3, k4 = jax.random.split(root, 4)
    # Case 1: single query tile per batch element, f32 compute (tight check).
    _run_case(k1, B=2, L=8, D=32, H=4, q_block=None)
    # Case 2: exercises the Lq tiling + K/V/mask scratch-carry path (2 tiles).
    _run_case(k2, B=2, L=16, D=32, H=4, q_block=8)
    # Case 3: bf16 MXU operands + approx reciprocal (loose check vs f32 ref).
    _run_case(k3, B=2, L=16, D=32, H=4, q_block=8,
              compute_dtype=jnp.bfloat16, rtol=5e-2, atol=5e-2, dot_atol=5e-2)
    # Case 4: dot_prod output disabled (flash-like, no (B,H,Lq,Lk) HBM write).
    _run_case(k4, B=2, L=16, D=32, H=4, q_block=8, return_dot_prod=False)
    print("KERNEL_OK")
</pallas_src>

<mosaic_0001>
module attributes {stable_mosaic.version = 11 : i64} {
  func.func @_mha_kernel(%arg0: i32, %arg1: i32, %arg2: memref<1x8x32xf32, #tpu.memory_space<vmem>>, %arg3: memref<1x8x32xf32, #tpu.memory_space<vmem>>, %arg4: memref<1x8x32xf32, #tpu.memory_space<vmem>>, %arg5: memref<1x1x8xi32, #tpu.memory_space<vmem>>, %arg6: memref<32x32xf32, #tpu.memory_space<vmem>>, %arg7: memref<1x32xf32, #tpu.memory_space<vmem>>, %arg8: memref<32x32xf32, #tpu.memory_space<vmem>>, %arg9: memref<1x32xf32, #tpu.memory_space<vmem>>, %arg10: memref<32x32xf32, #tpu.memory_space<vmem>>, %arg11: memref<1x32xf32, #tpu.memory_space<vmem>>, %arg12: memref<32x32xf32, #tpu.memory_space<vmem>>, %arg13: memref<1x32xf32, #tpu.memory_space<vmem>>, %arg14: memref<1x8x32xf32, #tpu.memory_space<vmem>>, %arg15: memref<1x4x8x8xf32, #tpu.memory_space<vmem>>, %arg16: memref<1x4x8x8xf32, #tpu.memory_space<vmem>>, %arg17: memref<1x4x8x8xf32, #tpu.memory_space<vmem>>, %arg18: memref<4x8x8xf32, #tpu.memory_space<vmem>>, %arg19: memref<4x8x8xf32, #tpu.memory_space<vmem>>, %arg20: memref<1x8xf32, #tpu.memory_space<vmem>>) attributes {dimension_semantics = [#tpu.dimension_semantics<parallel>, #tpu.dimension_semantics<arbitrary>], iteration_bounds = array<i64: 2, 1>, scalar_prefetch = 0 : i64, scratch_operands = 3 : i64, tpu.core_type = #tpu.core_type<tc>, window_params = [{transform_indices = @transform_0, window_bounds = array<i64: 1, 8, 32>}, {transform_indices = @transform_1, window_bounds = array<i64: 1, 8, 32>}, {transform_indices = @transform_2, window_bounds = array<i64: 1, 8, 32>}, {transform_indices = @transform_3, window_bounds = array<i64: 1, 1, 8>}, {pipeline_mode = #tpu.pipeline_mode<synchronous>, transform_indices = @transform_4, window_bounds = array<i64: 32, 32>}, {pipeline_mode = #tpu.pipeline_mode<synchronous>, transform_indices = @transform_5, window_bounds = array<i64: 1, 32>}, {pipeline_mode = #tpu.pipeline_mode<synchronous>, transform_indices = @transform_6, window_bounds = array<i64: 32, 32>}, {pipeline_mode = #tpu.pipeline_mode<synchronous>, transform_indices = @transform_7, window_bounds = array<i64: 1, 32>}, {pipeline_mode = #tpu.pipeline_mode<synchronous>, transform_indices = @transform_8, window_bounds = array<i64: 32, 32>}, {pipeline_mode = #tpu.pipeline_mode<synchronous>, transform_indices = @transform_9, window_bounds = array<i64: 1, 32>}, {pipeline_mode = #tpu.pipeline_mode<synchronous>, transform_indices = @transform_10, window_bounds = array<i64: 32, 32>}, {pipeline_mode = #tpu.pipeline_mode<synchronous>, transform_indices = @transform_11, window_bounds = array<i64: 1, 32>}, {transform_indices = @transform_12, window_bounds = array<i64: 1, 8, 32>}, {transform_indices = @transform_13, window_bounds = array<i64: 1, 4, 8, 8>}, {transform_indices = @transform_14, window_bounds = array<i64: 1, 4, 8, 8>}, {transform_indices = @transform_15, window_bounds = array<i64: 1, 4, 8, 8>}]} {
    %c0_i32 = arith.constant 0 : i32
    %0 = arith.cmpi eq, %arg1, %c0_i32 : i32
    %1 = arith.extui %0 : i1 to i32
    %c0_i32_0 = arith.constant 0 : i32
    %2 = arith.cmpi ne, %1, %c0_i32_0 : i32
    scf.if %2 {
      %c0_31 = arith.constant 0 : index
      %c0_32 = arith.constant 0 : index
      %c0_33 = arith.constant 0 : index
      %43 = vector.load %arg3[%c0_31, %c0_32, %c0_33] : memref<1x8x32xf32, #tpu.memory_space<vmem>>, vector<1x8x32xf32>
      %44 = vector.shape_cast %43 : vector<1x8x32xf32> to vector<8x32xf32>
      %c0_34 = arith.constant 0 : index
      %c0_35 = arith.constant 0 : index
      %c0_36 = arith.constant 0 : index
      %45 = vector.load %arg4[%c0_34, %c0_35, %c0_36] : memref<1x8x32xf32, #tpu.memory_space<vmem>>, vector<1x8x32xf32>
      %46 = vector.shape_cast %45 : vector<1x8x32xf32> to vector<8x32xf32>
      %c0_37 = arith.constant 0 : index
      %c0_38 = arith.constant 0 : index
      %47 = vector.load %arg8[%c0_37, %c0_38] : memref<32x32xf32, #tpu.memory_space<vmem>>, vector<32x32xf32>
      %cst_39 = arith.constant dense<0.000000e+00> : vector<8x32xf32>
      %48 = tpu.matmul %44, %47, %cst_39 {dimension_numbers = #tpu.dot_dimension_numbers<[1], [0], [0], [1], [0, 0, 1, 1], [], []>} : vector<8x32xf32>, vector<32x32xf32>, vector<8x32xf32> -> vector<8x32xf32>
      %c0_40 = arith.constant 0 : index
      %c0_41 = arith.constant 0 : index
      %49 = vector.load %arg9[%c0_40, %c0_41] : memref<1x32xf32, #tpu.memory_space<vmem>>, vector<1x32xf32>
      %50 = vector.broadcast %49 : vector<1x32xf32> to vector<8x32xf32>
      %51 = arith.addf %48, %50 : vector<8x32xf32>
      %c0_42 = arith.constant 0 : index
      %c0_43 = arith.constant 0 : index
      %52 = vector.load %arg10[%c0_42, %c0_43] : memref<32x32xf32, #tpu.memory_space<vmem>>, vector<32x32xf32>
      %cst_44 = arith.constant dense<0.000000e+00> : vector<8x32xf32>
      %53 = tpu.matmul %46, %52, %cst_44 {dimension_numbers = #tpu.dot_dimension_numbers<[1], [0], [0], [1], [0, 0, 1, 1], [], []>} : vector<8x32xf32>, vector<32x32xf32>, vector<8x32xf32> -> vector<8x32xf32>
      %c0_45 = arith.constant 0 : index
      %c0_46 = arith.constant 0 : index
      %54 = vector.load %arg11[%c0_45, %c0_46] : memref<1x32xf32, #tpu.memory_space<vmem>>, vector<1x32xf32>
      %55 = vector.broadcast %54 : vector<1x32xf32> to vector<8x32xf32>
      %56 = arith.addf %53, %55 : vector<8x32xf32>
      %57 = vector.shape_cast %51 : vector<8x32xf32> to vector<8x4x8xf32>
      %58 = tpu.transpose %57, [1, 0, 2] : vector<8x4x8xf32> -> vector<4x8x8xf32>
      %59 = vector.shape_cast %56 : vector<8x32xf32> to vector<8x4x8xf32>
      %60 = tpu.transpose %59, [1, 0, 2] : vector<8x4x8xf32> -> vector<4x8x8xf32>
      %c0_47 = arith.constant 0 : index
      %c0_48 = arith.constant 0 : index
      %c0_49 = arith.constant 0 : index
      %61 = vector.load %arg18[%c0_47, %c0_48, %c0_49] : memref<4x8x8xf32, #tpu.memory_space<vmem>>, vector<4x8x8xf32>
      tpu.vector_store %arg18[%c0_47, %c0_48, %c0_49], %58 {strides = array<i32>} : memref<4x8x8xf32, #tpu.memory_space<vmem>>, vector<4x8x8xf32>,
      %c0_50 = arith.constant 0 : index
      %c0_51 = arith.constant 0 : index
      %c0_52 = arith.constant 0 : index
      %62 = vector.load %arg19[%c0_50, %c0_51, %c0_52] : memref<4x8x8xf32, #tpu.memory_space<vmem>>, vector<4x8x8xf32>
      tpu.vector_store %arg19[%c0_50, %c0_51, %c0_52], %60 {strides = array<i32>} : memref<4x8x8xf32, #tpu.memory_space<vmem>>, vector<4x8x8xf32>,
      %c0_53 = arith.constant 0 : index
      %c0_54 = arith.constant 0 : index
      %c0_55 = arith.constant 0 : index
      %c0_56 = arith.constant 0 : index
      %63 = vector.load %arg16[%c0_53, %c0_54, %c0_55, %c0_56] : memref<1x4x8x8xf32, #tpu.memory_space<vmem>>, vector<1x4x8x8xf32>
      %64 = vector.shape_cast %63 : vector<1x4x8x8xf32> to vector<4x8x8xf32>
      %65 = vector.shape_cast %58 : vector<4x8x8xf32> to vector<1x4x8x8xf32>
      tpu.vector_store %arg16[%c0_53, %c0_54, %c0_55, %c0_56], %65 {strides = array<i32>} : memref<1x4x8x8xf32, #tpu.memory_space<vmem>>, vector<1x4x8x8xf32>,
      %c0_57 = arith.constant 0 : index
      %c0_58 = arith.constant 0 : index
      %c0_59 = arith.constant 0 : index
      %c0_60 = arith.constant 0 : index
      %66 = vector.load %arg17[%c0_57, %c0_58, %c0_59, %c0_60] : memref<1x4x8x8xf32, #tpu.memory_space<vmem>>, vector<1x4x8x8xf32>
      %67 = vector.shape_cast %66 : vector<1x4x8x8xf32> to vector<4x8x8xf32>
      %68 = vector.shape_cast %60 : vector<4x8x8xf32> to vector<1x4x8x8xf32>
      tpu.vector_store %arg17[%c0_57, %c0_58, %c0_59, %c0_60], %68 {strides = array<i32>} : memref<1x4x8x8xf32, #tpu.memory_space<vmem>>, vector<1x4x8x8xf32>,
      %c0_61 = arith.constant 0 : index
      %c0_62 = arith.constant 0 : index
      %c0_63 = arith.constant 0 : index
      %69 = vector.load %arg5[%c0_61, %c0_62, %c0_63] : memref<1x1x8xi32, #tpu.memory_space<vmem>>, vector<1x1x8xi32>
      %70 = vector.shape_cast %69 : vector<1x1x8xi32> to vector<1x8xi32>
      %c0_i32_64 = arith.constant 0 : i32
      %71 = vector.broadcast %c0_i32_64 : i32 to vector<1x8xi32>
      %72 = arith.cmpi eq, %70, %71 : vector<1x8xi32>
      %cst_65 = arith.constant -1.000000e+20 : f32
      %cst_66 = arith.constant 0.000000e+00 : f32
      %73 = vector.broadcast %cst_65 : f32 to vector<1x8xf32>
      %74 = vector.broadcast %cst_66 : f32 to vector<1x8xf32>
      %75 = arith.select %72, %73, %74 : vector<1x8xi1>, vector<1x8xf32>
      %c0_67 = arith.constant 0 : index
      %c0_68 = arith.constant 0 : index
      %76 = vector.load %arg20[%c0_67, %c0_68] : memref<1x8xf32, #tpu.memory_space<vmem>>, vector<1x8xf32>
      tpu.vector_store %arg20[%c0_67, %c0_68], %75 {strides = array<i32>} : memref<1x8xf32, #tpu.memory_space<vmem>>, vector<1x8xf32>,
    } else {
    }
    %c0 = arith.constant 0 : index
    %c0_1 = arith.constant 0 : index
    %c0_2 = arith.constant 0 : index
    %3 = vector.load %arg2[%c0, %c0_1, %c0_2] : memref<1x8x32xf32, #tpu.memory_space<vmem>>, vector<1x8x32xf32>
    %4 = vector.shape_cast %3 : vector<1x8x32xf32> to vector<8x32xf32>
    %c0_3 = arith.constant 0 : index
    %c0_4 = arith.constant 0 : index
    %5 = vector.load %arg6[%c0_3, %c0_4] : memref<32x32xf32, #tpu.memory_space<vmem>>, vector<32x32xf32>
    %cst = arith.constant dense<0.000000e+00> : vector<8x32xf32>
    %6 = tpu.matmul %4, %5, %cst {dimension_numbers = #tpu.dot_dimension_numbers<[1], [0], [0], [1], [0, 0, 1, 1], [], []>} : vector<8x32xf32>, vector<32x32xf32>, vector<8x32xf32> -> vector<8x32xf32>
    %c0_5 = arith.constant 0 : index
    %c0_6 = arith.constant 0 : index
    %7 = vector.load %arg7[%c0_5, %c0_6] : memref<1x32xf32, #tpu.memory_space<vmem>>, vector<1x32xf32>
    %8 = vector.broadcast %7 : vector<1x32xf32> to vector<8x32xf32>
    %9 = arith.addf %6, %8 : vector<8x32xf32>
    %10 = vector.shape_cast %9 : vector<8x32xf32> to vector<8x4x8xf32>
    %11 = tpu.transpose %10, [1, 0, 2] : vector<8x4x8xf32> -> vector<4x8x8xf32>
    %c0_7 = arith.constant 0 : index
    %c0_8 = arith.constant 0 : index
    %c0_9 = arith.constant 0 : index
    %12 = vector.load %arg18[%c0_7, %c0_8, %c0_9] : memref<4x8x8xf32, #tpu.memory_space<vmem>>, vector<4x8x8xf32>
    "tpu.trace_start"() <{level = 10 : i32, message = "hqd,hkd->hqk"}> : () -> ()
    %cst_10 = arith.constant dense<0.000000e+00> : vector<4x8x8xf32>
    %13 = tpu.matmul %11, %12, %cst_10 {dimension_numbers = #tpu.dot_dimension_numbers<[2], [2], [1], [1], [0, 0, 0, 1, 1, 1], [0], [0]>} : vector<4x8x8xf32>, vector<4x8x8xf32>, vector<4x8x8xf32> -> vector<4x8x8xf32>
    "tpu.trace_stop"() : () -> ()
    %c0_11 = arith.constant 0 : index
    %c0_12 = arith.constant 0 : index
    %14 = vector.load %arg20[%c0_11, %c0_12] : memref<1x8xf32, #tpu.memory_space<vmem>>, vector<1x8xf32>
    %15 = vector.shape_cast %14 : vector<1x8xf32> to vector<1x1x8xf32>
    %16 = vector.broadcast %15 : vector<1x1x8xf32> to vector<4x8x8xf32>
    %17 = arith.addf %13, %16 : vector<4x8x8xf32>
    %c0_13 = arith.constant 0 : index
    %c0_14 = arith.constant 0 : index
    %c0_15 = arith.constant 0 : index
    %c0_16 = arith.constant 0 : index
    %18 = vector.load %arg15[%c0_13, %c0_14, %c0_15, %c0_16] : memref<1x4x8x8xf32, #tpu.memory_space<vmem>>, vector<1x4x8x8xf32>
    %19 = vector.shape_cast %18 : vector<1x4x8x8xf32> to vector<4x8x8xf32>
    %20 = vector.shape_cast %17 : vector<4x8x8xf32> to vector<1x4x8x8xf32>
    tpu.vector_store %arg15[%c0_13, %c0_14, %c0_15, %c0_16], %20 {strides = array<i32>} : memref<1x4x8x8xf32, #tpu.memory_space<vmem>>, vector<1x4x8x8xf32>,
    %cst_17 = arith.constant dense<0xFF800000> : vector<4x8xf32>
    %21 = vector.multi_reduction <maximumf>, %17, %cst_17 [2] : vector<4x8x8xf32> to vector<4x8xf32>
    %22 = vector.shape_cast %21 : vector<4x8xf32> to vector<4x8x1xf32>
    %23 = vector.broadcast %22 : vector<4x8x1xf32> to vector<4x8x8xf32>
    %24 = arith.subf %17, %23 : vector<4x8x8xf32>
    %25 = math.exp %24 : vector<4x8x8xf32>
    %cst_18 = arith.constant dense<0.000000e+00> : vector<4x8xf32>
    %26 = vector.multi_reduction <add>, %25, %cst_18 [2] : vector<4x8x8xf32> to vector<4x8xf32>
    %27 = vector.shape_cast %26 : vector<4x8xf32> to vector<4x8x1xf32>
    %28 = tpu.reciprocal %27 : vector<4x8x1xf32> -> vector<4x8x1xf32>
    %29 = vector.broadcast %28 : vector<4x8x1xf32> to vector<4x8x8xf32>
    %30 = arith.mulf %25, %29 : vector<4x8x8xf32>
    %c0_19 = arith.constant 0 : index
    %c0_20 = arith.constant 0 : index
    %c0_21 = arith.constant 0 : index
    %31 = vector.load %arg19[%c0_19, %c0_20, %c0_21] : memref<4x8x8xf32, #tpu.memory_space<vmem>>, vector<4x8x8xf32>
    "tpu.trace_start"() <{level = 10 : i32, message = "hqk,hkd->hqd"}> : () -> ()
    %cst_22 = arith.constant dense<0.000000e+00> : vector<4x8x8xf32>
    %32 = tpu.matmul %30, %31, %cst_22 {dimension_numbers = #tpu.dot_dimension_numbers<[2], [1], [1], [2], [0, 0, 0, 1, 1, 2], [0], [0]>} : vector<4x8x8xf32>, vector<4x8x8xf32>, vector<4x8x8xf32> -> vector<4x8x8xf32>
    "tpu.trace_stop"() : () -> ()
    %33 = tpu.transpose %32, [1, 0, 2] : vector<4x8x8xf32> -> vector<8x4x8xf32>
    %34 = vector.shape_cast %33 : vector<8x4x8xf32> to vector<8x32xf32>
    %c0_23 = arith.constant 0 : index
    %c0_24 = arith.constant 0 : index
    %35 = vector.load %arg12[%c0_23, %c0_24] : memref<32x32xf32, #tpu.memory_space<vmem>>, vector<32x32xf32>
    %cst_25 = arith.constant dense<0.000000e+00> : vector<8x32xf32>
    %36 = tpu.matmul %34, %35, %cst_25 {dimension_numbers = #tpu.dot_dimension_numbers<[1], [0], [0], [1], [0, 0, 1, 1], [], []>} : vector<8x32xf32>, vector<32x32xf32>, vector<8x32xf32> -> vector<8x32xf32>
    %c0_26 = arith.constant 0 : index
    %c0_27 = arith.constant 0 : index
    %37 = vector.load %arg13[%c0_26, %c0_27] : memref<1x32xf32, #tpu.memory_space<vmem>>, vector<1x32xf32>
    %38 = vector.broadcast %37 : vector<1x32xf32> to vector<8x32xf32>
    %39 = arith.addf %36, %38 : vector<8x32xf32>
    %c0_28 = arith.constant 0 : index
    %c0_29 = arith.constant 0 : index
    %c0_30 = arith.constant 0 : index
    %40 = vector.load %arg14[%c0_28, %c0_29, %c0_30] : memref<1x8x32xf32, #tpu.memory_space<vmem>>, vector<1x8x32xf32>
    %41 = vector.shape_cast %40 : vector<1x8x32xf32> to vector<8x32xf32>
    %42 = vector.shape_cast %39 : vector<8x32xf32> to vector<1x8x32xf32>
    tpu.vector_store %arg14[%c0_28, %c0_29, %c0_30], %42 {strides = array<i32>} : memref<1x8x32xf32, #tpu.memory_space<vmem>>, vector<1x8x32xf32>,
    return
  }
  func.func @transform_0(%arg0: i32, %arg1: i32) -> (i32, i32, i32) {
    %c0_i32 = arith.constant 0 : i32
    %c0_i32_0 = arith.constant 0 : i32
    return %arg0, %arg1, %c0_i32 : i32, i32, i32
  }
  func.func @transform_1(%arg0: i32, %arg1: i32) -> (i32, i32, i32) {
    %c0_i32 = arith.constant 0 : i32
    %c0_i32_0 = arith.constant 0 : i32
    %c0_i32_1 = arith.constant 0 : i32
    return %arg0, %c0_i32, %c0_i32_0 : i32, i32, i32
  }
  func.func @transform_2(%arg0: i32, %arg1: i32) -> (i32, i32, i32) {
    %c0_i32 = arith.constant 0 : i32
    %c0_i32_0 = arith.constant 0 : i32
    %c0_i32_1 = arith.constant 0 : i32
    return %arg0, %c0_i32, %c0_i32_0 : i32, i32, i32
  }
  func.func @transform_3(%arg0: i32, %arg1: i32) -> (i32, i32, i32) {
    %c0_i32 = arith.constant 0 : i32
    %c0_i32_0 = arith.constant 0 : i32
    %c0_i32_1 = arith.constant 0 : i32
    return %arg0, %c0_i32, %c0_i32_0 : i32, i32, i32
  }
  func.func @transform_4(%arg0: i32, %arg1: i32) -> (i32, i32) {
    %c0_i32 = arith.constant 0 : i32
    %c0_i32_0 = arith.constant 0 : i32
    %c0_i32_1 = arith.constant 0 : i32
    return %c0_i32, %c0_i32_0 : i32, i32
  }
  func.func @transform_5(%arg0: i32, %arg1: i32) -> (i32, i32) {
    %c0_i32 = arith.constant 0 : i32
    %c0_i32_0 = arith.constant 0 : i32
    %c0_i32_1 = arith.constant 0 : i32
    return %c0_i32, %c0_i32_0 : i32, i32
  }
  func.func @transform_6(%arg0: i32, %arg1: i32) -> (i32, i32) {
    %c0_i32 = arith.constant 0 : i32
    %c0_i32_0 = arith.constant 0 : i32
    %c0_i32_1 = arith.constant 0 : i32
    return %c0_i32, %c0_i32_0 : i32, i32
  }
  func.func @transform_7(%arg0: i32, %arg1: i32) -> (i32, i32) {
    %c0_i32 = arith.constant 0 : i32
    %c0_i32_0 = arith.constant 0 : i32
    %c0_i32_1 = arith.constant 0 : i32
    return %c0_i32, %c0_i32_0 : i32, i32
  }
  func.func @transform_8(%arg0: i32, %arg1: i32) -> (i32, i32) {
    %c0_i32 = arith.constant 0 : i32
    %c0_i32_0 = arith.constant 0 : i32
    %c0_i32_1 = arith.constant 0 : i32
    return %c0_i32, %c0_i32_0 : i32, i32
  }
  func.func @transform_9(%arg0: i32, %arg1: i32) -> (i32, i32) {
    %c0_i32 = arith.constant 0 : i32
    %c0_i32_0 = arith.constant 0 : i32
    %c0_i32_1 = arith.constant 0 : i32
    return %c0_i32, %c0_i32_0 : i32, i32
  }
  func.func @transform_10(%arg0: i32, %arg1: i32) -> (i32, i32) {
    %c0_i32 = arith.constant 0 : i32
    %c0_i32_0 = arith.constant 0 : i32
    %c0_i32_1 = arith.constant 0 : i32
    return %c0_i32, %c0_i32_0 : i32, i32
  }
  func.func @transform_11(%arg0: i32, %arg1: i32) -> (i32, i32) {
    %c0_i32 = arith.constant 0 : i32
    %c0_i32_0 = arith.constant 0 : i32
    %c0_i32_1 = arith.constant 0 : i32
    return %c0_i32, %c0_i32_0 : i32, i32
  }
  func.func @transform_12(%arg0: i32, %arg1: i32) -> (i32, i32, i32) {
    %c0_i32 = arith.constant 0 : i32
    %c0_i32_0 = arith.constant 0 : i32
    return %arg0, %arg1, %c0_i32 : i32, i32, i32
  }
  func.func @transform_13(%arg0: i32, %arg1: i32) -> (i32, i32, i32, i32) {
    %c0_i32 = arith.constant 0 : i32
    %c0_i32_0 = arith.constant 0 : i32
    %c0_i32_1 = arith.constant 0 : i32
    return %arg0, %c0_i32, %arg1, %c0_i32_0 : i32, i32, i32, i32
  }
  func.func @transform_14(%arg0: i32, %arg1: i32) -> (i32, i32, i32, i32) {
    %c0_i32 = arith.constant 0 : i32
    %c0_i32_0 = arith.constant 0 : i32
    %c0_i32_1 = arith.constant 0 : i32
    %c0_i32_2 = arith.constant 0 : i32
    return %arg0, %c0_i32, %c0_i32_0, %c0_i32_1 : i32, i32, i32, i32
  }
  func.func @transform_15(%arg0: i32, %arg1: i32) -> (i32, i32, i32, i32) {
    %c0_i32 = arith.constant 0 : i32
    %c0_i32_0 = arith.constant 0 : i32
    %c0_i32_1 = arith.constant 0 : i32
    %c0_i32_2 = arith.constant 0 : i32
    return %arg0, %c0_i32, %c0_i32_0, %c0_i32_1 : i32, i32, i32, i32
  }
}

</mosaic_0001>

<llo_original>
// kernel: tpu_custom_call.1
$region0: #{tpu_custom_call.1}
  #allocation0 [shape = 'u32[]', space=smem, size = 0x4, offset = 0x4, fixed_abs, tag = 'smem constant byte address 0x4 - core index']
  #allocation1 [shape = 'u32[144,128]{1,0:T(1,128)}', space=vmem, size = 0x12000, scoped, tag = 'internal scratch']
  #allocation2 [shape = 'f32[4,8,8]{2,1,0:T(8,128)}', space=vmem, size = 0x4000, scoped, tag = 'scratch operand']
  #allocation3 [shape = 'f32[4,8,8]{2,1,0:T(8,128)}', space=vmem, size = 0x4000, scoped, tag = 'scratch operand']
  #allocation4 [shape = 'f32[1,8]{1,0:T(1,128)}', space=vmem, size = 0x200, scoped, tag = 'scratch operand']
  %s0 = inlined_call_operand.hbm [shape: f32[2,8,32], index: 0, kind: input, shape index: {}]
  %s1 = inlined_call_operand.hbm [shape: f32[2,8,32], index: 1, kind: input, shape index: {}]
  %s2 = inlined_call_operand.hbm [shape: f32[2,8,32], index: 2, kind: input, shape index: {}]
  %s3 = inlined_call_operand.vmem [shape: s32[2,1,8], index: 3, kind: input, shape index: {}]
  %s4 = inlined_call_operand.hbm [shape: f32[32,32], index: 4, kind: input, shape index: {}]
  %s5 = inlined_call_operand.vmem [shape: f32[1,32], index: 5, kind: input, shape index: {}]
  %s6 = inlined_call_operand.hbm [shape: f32[32,32], index: 6, kind: input, shape index: {}]
  %s7 = inlined_call_operand.vmem [shape: f32[1,32], index: 7, kind: input, shape index: {}]
  %s8 = inlined_call_operand.hbm [shape: f32[32,32], index: 8, kind: input, shape index: {}]
  %s9 = inlined_call_operand.vmem [shape: f32[1,32], index: 9, kind: input, shape index: {}]
  %s10 = inlined_call_operand.vmem [shape: f32[32,32], index: 10, kind: input, shape index: {}]
  %s11 = inlined_call_operand.vmem [shape: f32[1,32], index: 11, kind: input, shape index: {}]
  %s12 = inlined_call_operand.hbm [shape: f32[2,8,32], index: 12, kind: output, shape index: {0}]
  %s13 = inlined_call_operand.hbm [shape: f32[2,4,8,8], index: 13, kind: output, shape index: {1}]
  %s14 = inlined_call_operand.hbm [shape: f32[2,4,8,8], index: 14, kind: output, shape index: {2}]
  %s15 = inlined_call_operand.hbm [shape: f32[2,4,8,8], index: 15, kind: output, shape index: {3}]
  %16 = xla_tuple %s12, %s13, %s14, %s15
  %s17 = sld [smem:[#allocation0]]
  $region133: #{tpu_custom_call.1} parent=0
    _
  %s19 = ssub.s32 1, %s17
  %s20 = scalar_select 0, %s19, %s17
  $region1: #{tpu_custom_call.1} parent=0
    #allocation5 [shape = 'u8[8192]{0}', space=vmem, size = 0x2000, scoped, tag = 'input window, operand 0']
    #allocation6 [shape = 's32[2]{0}', space=sflag, size = 0x8, scoped, tag = 'scoped memory for tpu_custom_call.1']
    #allocation7 [shape = 's32[2]{0}', space=sflag, size = 0x8, scoped, tag = 'scoped memory for tpu_custom_call.1']
    #allocation8 [shape = 'u8[8192]{0}', space=vmem, size = 0x2000, scoped, tag = 'input window, operand 1']
    #allocation9 [shape = 's32[2]{0}', space=sflag, size = 0x8, scoped, tag = 'scoped memory for tpu_custom_call.1']
    #allocation10 [shape = 'u8[8192]{0}', space=vmem, size = 0x2000, scoped, tag = 'input window, operand 2']
    #allocation11 [shape = 'u8[16384]{0}', space=vmem, size = 0x4000, scoped, tag = 'input window, operand 4, single buffered']
    #allocation12 [shape = 's32[1]{0}', space=sflag, size = 0x4, scoped, tag = 'scoped memory for tpu_custom_call.1']
    #allocation13 [shape = 'u8[16384]{0}', space=vmem, size = 0x4000, scoped, tag = 'input window, operand 6, single buffered']
    #allocation14 [shape = 'u8[16384]{0}', space=vmem, size = 0x4000, scoped, tag = 'input window, operand 8, single buffered']
    #allocation15 [shape = 's32[1]{0}', space=sflag, size = 0x4, scoped, tag = 'scoped memory for tpu_custom_call.1']
    #allocation16 [shape = 'u8[8192]{0}', space=vmem, size = 0x2000, scoped, tag = 'output window, operand 0']
    #allocation17 [shape = 'u8[32768]{0}', space=vmem, size = 0x8000, scoped, tag = 'output window, operand 1']
    #allocation18 [shape = 's32[2]{0}', space=sflag, size = 0x8, scoped, tag = 'scoped memory for tpu_custom_call.1']
    #allocation19 [shape = 'u8[32768]{0}', space=vmem, size = 0x8000, scoped, tag = 'output window, operand 2']
    #allocation20 [shape = 'u8[32768]{0}', space=vmem, size = 0x8000, scoped, tag = 'output window, operand 3']
    #allocation21 [shape = 's32[2]{0}', space=sflag, size = 0x8, scoped, tag = 'scoped memory for tpu_custom_call.1']
    %21 = vsyncpa [#allocation6], 0
    %s22 = scalar_lea.sflag [#allocation6], 1
    %23 = vsyncpa %s22, 0
    %24 = vsyncpa [#allocation9], 0
    %s25 = scalar_lea.sflag [#allocation9], 1
    %26 = vsyncpa %s25, 0
    %27 = vsyncpa [#allocation12], 0
    %28 = vsyncpa [#allocation15], 0
    %29 = vsyncpa [#allocation7], 0
    %s30 = scalar_lea.sflag [#allocation7], 1
    %31 = vsyncpa %s30, 0
    %32 = vsyncpa [#allocation18], 0
    %s33 = scalar_lea.sflag [#allocation18], 1
    %34 = vsyncpa %s33, 0
    %35 = vsyncpa [#allocation21], 0
    %s36 = scalar_lea.sflag [#allocation21], 1
    %37 = vsyncpa %s36, 0
    loop: start=0, step=1, limit=4
    $region2: #{tpu_custom_call.1} parent=1 // loop_pre_header
      _
    $region3: #{tpu_custom_call.1} parent=1 // loop_header
      %s39 = sphi 0, %s43
      %p40 = scmp.ge.s32.totalorder %s39, 4
      %s46 = sphi 0, %s58
      %s47 = sphi 0, %s54
      %s48 = sphi 0, %s46
      %s49 = sphi 0, %s47
      %s50 = sphi 0, %s48
      %s51 = sphi 0, %s49
      %s63 = sphi 0, %s65
      %s66 = sphi 0, %s63
      %s67 = sphi 0, %s66
      %s83 = sphi 0, %s67
      %s89 = sphi 0, %s91
      %s92 = sphi 0, %s89
      %s93 = sphi 0, %s92
      %s109 = sphi 0, %s93
      %s115 = sphi 0, %s117
      %s118 = sphi 0, %s115
      %s119 = sphi 0, %s118
      %s135 = sphi 0, %s119
      %s141 = sphi 0, %s143
      %s144 = sphi 0, %s141
      %s145 = sphi 0, %s144
      %s161 = sphi 0, %s145
      %s165 = sphi 0, %s165
      %s167 = sphi 0, %s165
      %s168 = sphi 0, %s167
      %s182 = sphi 0, %s168
      %s186 = sphi 0, %s186
      %s188 = sphi 0, %s186
      %s189 = sphi 0, %s188
      %s203 = sphi 0, %s189
      %s207 = sphi 0, %s207
      %s209 = sphi 0, %s207
      %s210 = sphi 0, %s209
      %s224 = sphi 0, %s210
      %s228 = sphi 0, %s228
      %s230 = sphi 0, %s228
      %s231 = sphi 0, %s230
      %s245 = sphi 0, %s231
      %s249 = sphi 0, %s249
      %s251 = sphi 0, %s249
      %s252 = sphi 0, %s251
      %s266 = sphi 0, %s252
      %s270 = sphi 0, %s270
      %s272 = sphi 0, %s270
      %s273 = sphi 0, %s272
      %s287 = sphi 0, %s273
      %s291 = sphi 0, %s291
      %s293 = sphi 0, %s291
      %s294 = sphi 0, %s293
      %s308 = sphi 0, %s294
      %s312 = sphi 0, %s312
      %s314 = sphi 0, %s312
      %s315 = sphi 0, %s314
      %s329 = sphi 0, %s315
      %s337 = sphi 0, %s339
      %s340 = sphi 0, %s337
      %s341 = sphi 0, %s340
      %s357 = sphi 0, %s341
      %s365 = sphi 0, %s367
      %s368 = sphi 0, %s365
      %s369 = sphi 0, %s368
      %s385 = sphi 0, %s369
      %s391 = sphi 0, %s393
      %s394 = sphi 0, %s391
      %s395 = sphi 0, %s394
      %s411 = sphi 0, %s395
      %s417 = sphi 0, %s419
      %s420 = sphi 0, %s417
      %s421 = sphi 0, %s420
      %s437 = sphi 0, %s421
    $region4: #{tpu_custom_call.1} parent=1 // loop_header_branch
      %42 = sbr.rel (%p40) target = $region8
    $region5: #{tpu_custom_call.1} parent=1 // loop_body
      %s44 = ssub.s32 %s39, 1
      %s45 = ssub.s32 %s39, 2
      %s52 = sadd.s32 1, %s47
      %p53 = scmp.ge.s32.totalorder %s52, 1
      %s54 = scalar_select %p53, 0, %s52
      %s55 = sadd.s32 1, %s46
      %s56 = scalar_select %p53, %s55, %s46
      %p57 = scmp.ge.s32.totalorder %s56, 2
      %s58 = scalar_select %p57, 0, %s56
      %s59 = ssub.s32 %s46, %s58
      %s60 = ssub.s32 %s47, %s54
      %s61 = sor.u32 %s59, %s60
      %p62 = scmp.eq.s32.totalorder %s61, 0
      %s64 = sadd.s32 %s63, 1
      %s65 = scalar_select %p62, %s63, %s64
      %p68 = pneg %p62
      %p69 = scmp.eq.s32.totalorder %s39, 1
      %p70 = por %p68, %p69
      %p71 = scmp.ne.s32.totalorder %s63, %s66
      %p72 = scmp.eq.s32.totalorder %s39, 0
      %p73 = por %p71, %p72
      %p74 = scmp.ne.s32.totalorder %s63, %s66
      %p75 = scmp.eq.s32.totalorder %s44, 1
      %p76 = por %p74, %p75
      %p77 = scmp.ne.s32.totalorder %s66, %s67
      %p78 = scmp.eq.s32.totalorder %s44, 0
      %p79 = por %p77, %p78
      %p80 = scmp.ne.s32.totalorder %s66, %s67
      %p81 = scmp.eq.s32.totalorder %s45, 1
      %p82 = por %p80, %p81
      %p84 = scmp.ne.s32.totalorder %s67, %s83
      %p85 = scmp.eq.s32.totalorder %s45, 0
      %p86 = por %p84, %p85
      %s87 = ssub.s32 %s46, %s58
      %p88 = scmp.eq.s32.totalorder %s87, 0
      %s90 = sadd.s32 %s89, 1
      %s91 = scalar_select %p88, %s89, %s90
      %p94 = pneg %p88
      %p95 = scmp.eq.s32.totalorder %s39, 1
      %p96 = por %p94, %p95
      %p97 = scmp.ne.s32.totalorder %s89, %s92
      %p98 = scmp.eq.s32.totalorder %s39, 0
      %p99 = por %p97, %p98
      %p100 = scmp.ne.s32.totalorder %s89, %s92
      %p101 = scmp.eq.s32.totalorder %s44, 1
      %p102 = por %p100, %p101
      %p103 = scmp.ne.s32.totalorder %s92, %s93
      %p104 = scmp.eq.s32.totalorder %s44, 0
      %p105 = por %p103, %p104
      %p106 = scmp.ne.s32.totalorder %s92, %s93
      %p107 = scmp.eq.s32.totalorder %s45, 1
      %p108 = por %p106, %p107
      %p110 = scmp.ne.s32.totalorder %s93, %s109
      %p111 = scmp.eq.s32.totalorder %s45, 0
      %p112 = por %p110, %p111
      %s113 = ssub.s32 %s46, %s58
      %p114 = scmp.eq.s32.totalorder %s113, 0
      %s116 = sadd.s32 %s115, 1
      %s117 = scalar_select %p114, %s115, %s116
      %p120 = pneg %p114
      %p121 = scmp.eq.s32.totalorder %s39, 1
      %p122 = por %p120, %p121
      %p123 = scmp.ne.s32.totalorder %s115, %s118
      %p124 = scmp.eq.s32.totalorder %s39, 0
      %p125 = por %p123, %p124
      %p126 = scmp.ne.s32.totalorder %s115, %s118
      %p127 = scmp.eq.s32.totalorder %s44, 1
      %p128 = por %p126, %p127
      %p129 = scmp.ne.s32.totalorder %s118, %s119
      %p130 = scmp.eq.s32.totalorder %s44, 0
      %p131 = por %p129, %p130
      %p132 = scmp.ne.s32.totalorder %s118, %s119
      %p133 = scmp.eq.s32.totalorder %s45, 1
      %p134 = por %p132, %p133
      %p136 = scmp.ne.s32.totalorder %s119, %s135
      %p137 = scmp.eq.s32.totalorder %s45, 0
      %p138 = por %p136, %p137
      %s139 = ssub.s32 %s46, %s58
      %p140 = scmp.eq.s32.totalorder %s139, 0
      %s142 = sadd.s32 %s141, 1
      %s143 = scalar_select %p140, %s141, %s142
      %p146 = pneg %p140
      %p147 = scmp.eq.s32.totalorder %s39, 1
      %p148 = por %p146, %p147
      %p149 = scmp.ne.s32.totalorder %s141, %s144
      %p150 = scmp.eq.s32.totalorder %s39, 0
      %p151 = por %p149, %p150
      %p152 = scmp.ne.s32.totalorder %s141, %s144
      %p153 = scmp.eq.s32.totalorder %s44, 1
      %p154 = por %p152, %p153
      %p155 = scmp.ne.s32.totalorder %s144, %s145
      %p156 = scmp.eq.s32.totalorder %s44, 0
      %p157 = por %p155, %p156
      %p158 = scmp.ne.s32.totalorder %s144, %s145
      %p159 = scmp.eq.s32.totalorder %s45, 1
      %p160 = por %p158, %p159
      %p162 = scmp.ne.s32.totalorder %s145, %s161
      %p163 = scmp.eq.s32.totalorder %s45, 0
      %p164 = por %p162, %p163
      %s166 = sadd.s32 %s165, 1
      %p169 = scmp.eq.s32.totalorder %s39, 1
      %p170 = scmp.ne.s32.totalorder %s165, %s167
      %p171 = scmp.eq.s32.totalorder %s39, 0
      %p172 = por %p170, %p171
      %p173 = scmp.ne.s32.totalorder %s165, %s167
      %p174 = scmp.eq.s32.totalorder %s44, 1
      %p175 = por %p173, %p174
      %p176 = scmp.ne.s32.totalorder %s167, %s168
      %p177 = scmp.eq.s32.totalorder %s44, 0
      %p178 = por %p176, %p177
      %p179 = scmp.ne.s32.totalorder %s167, %s168
      %p180 = scmp.eq.s32.totalorder %s45, 1
      %p181 = por %p179, %p180
      %p183 = scmp.ne.s32.totalorder %s168, %s182
      %p184 = scmp.eq.s32.totalorder %s45, 0
      %p185 = por %p183, %p184
      %s187 = sadd.s32 %s186, 1
      %p190 = scmp.eq.s32.totalorder %s39, 1
      %p191 = scmp.ne.s32.totalorder %s186, %s188
      %p192 = scmp.eq.s32.totalorder %s39, 0
      %p193 = por %p191, %p192
      %p194 = scmp.ne.s32.totalorder %s186, %s188
      %p195 = scmp.eq.s32.totalorder %s44, 1
      %p196 = por %p194, %p195
      %p197 = scmp.ne.s32.totalorder %s188, %s189
      %p198 = scmp.eq.s32.totalorder %s44, 0
      %p199 = por %p197, %p198
      %p200 = scmp.ne.s32.totalorder %s188, %s189
      %p201 = scmp.eq.s32.totalorder %s45, 1
      %p202 = por %p200, %p201
      %p204 = scmp.ne.s32.totalorder %s189, %s203
      %p205 = scmp.eq.s32.totalorder %s45, 0
      %p206 = por %p204, %p205
      %s208 = sadd.s32 %s207, 1
      %p211 = scmp.eq.s32.totalorder %s39, 1
      %p212 = scmp.ne.s32.totalorder %s207, %s209
      %p213 = scmp.eq.s32.totalorder %s39, 0
      %p214 = por %p212, %p213
      %p215 = scmp.ne.s32.totalorder %s207, %s209
      %p216 = scmp.eq.s32.totalorder %s44, 1
      %p217 = por %p215, %p216
      %p218 = scmp.ne.s32.totalorder %s209, %s210
      %p219 = scmp.eq.s32.totalorder %s44, 0
      %p220 = por %p218, %p219
      %p221 = scmp.ne.s32.totalorder %s209, %s210
      %p222 = scmp.eq.s32.totalorder %s45, 1
      %p223 = por %p221, %p222
      %p225 = scmp.ne.s32.totalorder %s210, %s224
      %p226 = scmp.eq.s32.totalorder %s45, 0
      %p227 = por %p225, %p226
      %s229 = sadd.s32 %s228, 1
      %p232 = scmp.eq.s32.totalorder %s39, 1
      %p233 = scmp.ne.s32.totalorder %s228, %s230
      %p234 = scmp.eq.s32.totalorder %s39, 0
      %p235 = por %p233, %p234
      %p236 = scmp.ne.s32.totalorder %s228, %s230
      %p237 = scmp.eq.s32.totalorder %s44, 1
      %p238 = por %p236, %p237
      %p239 = scmp.ne.s32.totalorder %s230, %s231
      %p240 = scmp.eq.s32.totalorder %s44, 0
      %p241 = por %p239, %p240
      %p242 = scmp.ne.s32.totalorder %s230, %s231
      %p243 = scmp.eq.s32.totalorder %s45, 1
      %p244 = por %p242, %p243
      %p246 = scmp.ne.s32.totalorder %s231, %s245
      %p247 = scmp.eq.s32.totalorder %s45, 0
      %p248 = por %p246, %p247
      %s250 = sadd.s32 %s249, 1
      %p253 = scmp.eq.s32.totalorder %s39, 1
      %p254 = scmp.ne.s32.totalorder %s249, %s251
      %p255 = scmp.eq.s32.totalorder %s39, 0
      %p256 = por %p254, %p255
      %p257 = scmp.ne.s32.totalorder %s249, %s251
      %p258 = scmp.eq.s32.totalorder %s44, 1
      %p259 = por %p257, %p258
      %p260 = scmp.ne.s32.totalorder %s251, %s252
      %p261 = scmp.eq.s32.totalorder %s44, 0
      %p262 = por %p260, %p261
      %p263 = scmp.ne.s32.totalorder %s251, %s252
      %p264 = scmp.eq.s32.totalorder %s45, 1
      %p265 = por %p263, %p264
      %p267 = scmp.ne.s32.totalorder %s252, %s266
      %p268 = scmp.eq.s32.totalorder %s45, 0
      %p269 = por %p267, %p268
      %s271 = sadd.s32 %s270, 1
      %p274 = scmp.eq.s32.totalorder %s39, 1
      %p275 = scmp.ne.s32.totalorder %s270, %s272
      %p276 = scmp.eq.s32.totalorder %s39, 0
      %p277 = por %p275, %p276
      %p278 = scmp.ne.s32.totalorder %s270, %s272
      %p279 = scmp.eq.s32.totalorder %s44, 1
      %p280 = por %p278, %p279
      %p281 = scmp.ne.s32.totalorder %s272, %s273
      %p282 = scmp.eq.s32.totalorder %s44, 0
      %p283 = por %p281, %p282
      %p284 = scmp.ne.s32.totalorder %s272, %s273
      %p285 = scmp.eq.s32.totalorder %s45, 1
      %p286 = por %p284, %p285
      %p288 = scmp.ne.s32.totalorder %s273, %s287
      %p289 = scmp.eq.s32.totalorder %s45, 0
      %p290 = por %p288, %p289
      %s292 = sadd.s32 %s291, 1
      %p295 = scmp.eq.s32.totalorder %s39, 1
      %p296 = scmp.ne.s32.totalorder %s291, %s293
      %p297 = scmp.eq.s32.totalorder %s39, 0
      %p298 = por %p296, %p297
      %p299 = scmp.ne.s32.totalorder %s291, %s293
      %p300 = scmp.eq.s32.totalorder %s44, 1
      %p301 = por %p299, %p300
      %p302 = scmp.ne.s32.totalorder %s293, %s294
      %p303 = scmp.eq.s32.totalorder %s44, 0
      %p304 = por %p302, %p303
      %p305 = scmp.ne.s32.totalorder %s293, %s294
      %p306 = scmp.eq.s32.totalorder %s45, 1
      %p307 = por %p305, %p306
      %p309 = scmp.ne.s32.totalorder %s294, %s308
      %p310 = scmp.eq.s32.totalorder %s45, 0
      %p311 = por %p309, %p310
      %s313 = sadd.s32 %s312, 1
      %p316 = scmp.eq.s32.totalorder %s39, 1
      %p317 = scmp.ne.s32.totalorder %s312, %s314
      %p318 = scmp.eq.s32.totalorder %s39, 0
      %p319 = por %p317, %p318
      %p320 = scmp.ne.s32.totalorder %s312, %s314
      %p321 = scmp.eq.s32.totalorder %s44, 1
      %p322 = por %p320, %p321
      %p323 = scmp.ne.s32.totalorder %s314, %s315
      %p324 = scmp.eq.s32.totalorder %s44, 0
      %p325 = por %p323, %p324
      %p326 = scmp.ne.s32.totalorder %s314, %s315
      %p327 = scmp.eq.s32.totalorder %s45, 1
      %p328 = por %p326, %p327
      %p330 = scmp.ne.s32.totalorder %s315, %s329
      %p331 = scmp.eq.s32.totalorder %s45, 0
      %p332 = por %p330, %p331
      %s333 = ssub.s32 %s46, %s58
      %s334 = ssub.s32 %s47, %s54
      %s335 = sor.u32 %s333, %s334
      %p336 = scmp.eq.s32.totalorder %s335, 0
      %s338 = sadd.s32 %s337, 1
      %s339 = scalar_select %p336, %s337, %s338
      %p342 = pneg %p336
      %p343 = scmp.eq.s32.totalorder %s39, 1
      %p344 = por %p342, %p343
      %p345 = scmp.ne.s32.totalorder %s337, %s340
      %p346 = scmp.eq.s32.totalorder %s39, 0
      %p347 = por %p345, %p346
      %p348 = scmp.ne.s32.totalorder %s337, %s340
      %p349 = scmp.eq.s32.totalorder %s44, 1
      %p350 = por %p348, %p349
      %p351 = scmp.ne.s32.totalorder %s340, %s341
      %p352 = scmp.eq.s32.totalorder %s44, 0
      %p353 = por %p351, %p352
      %p354 = scmp.ne.s32.totalorder %s340, %s341
      %p355 = scmp.eq.s32.totalorder %s45, 1
      %p356 = por %p354, %p355
      %p358 = scmp.ne.s32.totalorder %s341, %s357
      %p359 = scmp.eq.s32.totalorder %s45, 0
      %p360 = por %p358, %p359
      %s361 = ssub.s32 %s46, %s58
      %s362 = ssub.s32 %s47, %s54
      %s363 = sor.u32 %s361, %s362
      %p364 = scmp.eq.s32.totalorder %s363, 0
      %s366 = sadd.s32 %s365, 1
      %s367 = scalar_select %p364, %s365, %s366
      %p370 = pneg %p364
      %p371 = scmp.eq.s32.totalorder %s39, 1
      %p372 = por %p370, %p371
      %p373 = scmp.ne.s32.totalorder %s365, %s368
      %p374 = scmp.eq.s32.totalorder %s39, 0
      %p375 = por %p373, %p374
      %p376 = scmp.ne.s32.totalorder %s365, %s368
      %p377 = scmp.eq.s32.totalorder %s44, 1
      %p378 = por %p376, %p377
      %p379 = scmp.ne.s32.totalorder %s368, %s369
      %p380 = scmp.eq.s32.totalorder %s44, 0
      %p381 = por %p379, %p380
      %p382 = scmp.ne.s32.totalorder %s368, %s369
      %p383 = scmp.eq.s32.totalorder %s45, 1
      %p384 = por %p382, %p383
      %p386 = scmp.ne.s32.totalorder %s369, %s385
      %p387 = scmp.eq.s32.totalorder %s45, 0
      %p388 = por %p386, %p387
      %s389 = ssub.s32 %s46, %s58
      %p390 = scmp.eq.s32.totalorder %s389, 0
      %s392 = sadd.s32 %s391, 1
      %s393 = scalar_select %p390, %s391, %s392
      %p396 = pneg %p390
      %p397 = scmp.eq.s32.totalorder %s39, 1
      %p398 = por %p396, %p397
      %p399 = scmp.ne.s32.totalorder %s391, %s394
      %p400 = scmp.eq.s32.totalorder %s39, 0
      %p401 = por %p399, %p400
      %p402 = scmp.ne.s32.totalorder %s391, %s394
      %p403 = scmp.eq.s32.totalorder %s44, 1
      %p404 = por %p402, %p403
      %p405 = scmp.ne.s32.totalorder %s394, %s395
      %p406 = scmp.eq.s32.totalorder %s44, 0
      %p407 = por %p405, %p406
      %p408 = scmp.ne.s32.totalorder %s394, %s395
      %p409 = scmp.eq.s32.totalorder %s45, 1
      %p410 = por %p408, %p409
      %p412 = scmp.ne.s32.totalorder %s395, %s411
      %p413 = scmp.eq.s32.totalorder %s45, 0
      %p414 = por %p412, %p413
      %s415 = ssub.s32 %s46, %s58
      %p416 = scmp.eq.s32.totalorder %s415, 0
      %s418 = sadd.s32 %s417, 1
      %s419 = scalar_select %p416, %s417, %s418
      %p422 = pneg %p416
      %p423 = scmp.eq.s32.totalorder %s39, 1
      %p424 = por %p422, %p423
      %p425 = scmp.ne.s32.totalorder %s417, %s420
      %p426 = scmp.eq.s32.totalorder %s39, 0
      %p427 = por %p425, %p426
      %p428 = scmp.ne.s32.totalorder %s417, %s420
      %p429 = scmp.eq.s32.totalorder %s44, 1
      %p430 = por %p428, %p429
      %p431 = scmp.ne.s32.totalorder %s420, %s421
      %p432 = scmp.eq.s32.totalorder %s44, 0
      %p433 = por %p431, %p432
      %p434 = scmp.ne.s32.totalorder %s420, %s421
      %p435 = scmp.eq.s32.totalorder %s45, 1
      %p436 = por %p434, %p435
      %p438 = scmp.ne.s32.totalorder %s421, %s437
      %p439 = scmp.eq.s32.totalorder %s45, 0
      %p440 = por %p438, %p439
      %p441 = scmp.le.s32.totalorder 1, %s39
      %p442 = scmp.lt.s32.totalorder %s39, 3
      %p443 = pnand %p441, %p442
      %p444 = pneg %p443
      // Predicated region
      $region9: #{tpu_custom_call.1} parent=5 // pred_check
        _
      $region10: #{tpu_custom_call.1} parent=5 // pred_check_branch
        %446 = sbr.rel (%p443) target = $region12
      $region11: #{tpu_custom_call.1} parent=5 // pred_region
        %s447 = ssub.s32 %s39, 1
        // Predicated region
        $region13: #{tpu_custom_call.1} parent=11 // pred_check
          %p448 = pneg %p178
        $region14: #{tpu_custom_call.1} parent=11 // pred_check_branch
          %450 = sbr.rel (%p448) target = $region16
        $region15: #{tpu_custom_call.1} parent=11 // pred_region
          %s452 = ssub.s32 512, 512
          %453 = vsyncadd [#allocation12], %s452
          %s454 = sshll.u32 [#allocation11], 4
          %s455 = int_to_ptr.vmem [resolvable:$true] %s454
          %460 = dma.hbm_to_vmem [thread:$0]  %s4, 512, %s455, [#allocation12], 128, 128, 8
        $region16: #{tpu_custom_call.1} parent=11 // pred_fallthru
          _
        // Predicated region
        $region17: #{tpu_custom_call.1} parent=11 // pred_check
          %p461 = pneg %p199
        $region18: #{tpu_custom_call.1} parent=11 // pred_check_branch
          %463 = sbr.rel (%p461) target = $region20
        $region19: #{tpu_custom_call.1} parent=11 // pred_region
          _
        $region20: #{tpu_custom_call.1} parent=11 // pred_fallthru
          _
        // Predicated region
        $region21: #{tpu_custom_call.1} parent=11 // pred_check
          %p464 = pneg %p220
        $region22: #{tpu_custom_call.1} parent=11 // pred_check_branch
          %466 = sbr.rel (%p464) target = $region24
        $region23: #{tpu_custom_call.1} parent=11 // pred_region
          %s468 = ssub.s32 512, 512
          %469 = vsyncadd [#allocation12], %s468
          %s470 = sshll.u32 [#allocation13], 4
          %s471 = int_to_ptr.vmem [resolvable:$true] %s470
          %476 = dma.hbm_to_vmem [thread:$0]  %s6, 512, %s471, [#allocation12], 128, 128, 8
        $region24: #{tpu_custom_call.1} parent=11 // pred_fallthru
          _
        // Predicated region
        $region25: #{tpu_custom_call.1} parent=11 // pred_check
          %p477 = pneg %p241
        $region26: #{tpu_custom_call.1} parent=11 // pred_check_branch
          %479 = sbr.rel (%p477) target = $region28
        $region27: #{tpu_custom_call.1} parent=11 // pred_region
          _
        $region28: #{tpu_custom_call.1} parent=11 // pred_fallthru
          _
        // Predicated region
        $region29: #{tpu_custom_call.1} parent=11 // pred_check
          %p480 = pneg %p262
        $region30: #{tpu_custom_call.1} parent=11 // pred_check_branch
          %482 = sbr.rel (%p480) target = $region32
        $region31: #{tpu_custom_call.1} parent=11 // pred_region
          %s484 = ssub.s32 512, 512
          %485 = vsyncadd [#allocation15], %s484
          %s486 = sshll.u32 [#allocation14], 4
          %s487 = int_to_ptr.vmem [resolvable:$true] %s486
          %492 = dma.hbm_to_vmem [thread:$0]  %s8, 512, %s487, [#allocation15], 128, 128, 8
        $region32: #{tpu_custom_call.1} parent=11 // pred_fallthru
          _
        // Predicated region
        $region33: #{tpu_custom_call.1} parent=11 // pred_check
          %p493 = pneg %p283
        $region34: #{tpu_custom_call.1} parent=11 // pred_check_branch
          %495 = sbr.rel (%p493) target = $region36
        $region35: #{tpu_custom_call.1} parent=11 // pred_region
          _
        $region36: #{tpu_custom_call.1} parent=11 // pred_fallthru
          _
        // Predicated region
        $region37: #{tpu_custom_call.1} parent=11 // pred_check
          %p496 = pneg %p304
        $region38: #{tpu_custom_call.1} parent=11 // pred_check_branch
          %498 = sbr.rel (%p496) target = $region40
        $region39: #{tpu_custom_call.1} parent=11 // pred_region
          _
        $region40: #{tpu_custom_call.1} parent=11 // pred_fallthru
          _
        // Predicated region
        $region41: #{tpu_custom_call.1} parent=11 // pred_check
          %p499 = pneg %p325
        $region42: #{tpu_custom_call.1} parent=11 // pred_check_branch
          %501 = sbr.rel (%p499) target = $region44
        $region43: #{tpu_custom_call.1} parent=11 // pred_region
          _
        $region44: #{tpu_custom_call.1} parent=11 // pred_fallthru
          _
      $region12: #{tpu_custom_call.1} parent=5 // pred_fallthru
        _
      %p502 = scmp.lt.s32.totalorder %s39, 2
      // Predicated region
      $region45: #{tpu_custom_call.1} parent=5 // pred_check
        %p503 = pneg %p502
      $region46: #{tpu_custom_call.1} parent=5 // pred_check_branch
        %505 = sbr.rel (%p503) target = $region48
      $region47: #{tpu_custom_call.1} parent=5 // pred_region
        // Predicated region
        $region49: #{tpu_custom_call.1} parent=47 // pred_check
          %p506 = pneg %p73
        $region50: #{tpu_custom_call.1} parent=47 // pred_check_branch
          %508 = sbr.rel (%p506) target = $region52
        $region51: #{tpu_custom_call.1} parent=47 // pred_region
          %s509 = sand.u32 %s63, 1
          %s510 = scalar_lea.sflag [#allocation6], %s509
          %s511 = sand.u32 %s63, 1
          %s512 = smul.addr %s511, 8
          %s513 = scalar_lea.vmem [#allocation5], %s512
          %s515 = ssub.s32 128, 128
          %516 = vsyncadd %s510, %s515
          %s517 = sadd.s32 %s47, %s46
          %s518 = smul.addr %s517, 128
          %s519 = scalar_lea.hbm %s0, %s518
          %s521 = sshll.u32 %s513, 4
          %s522 = int_to_ptr.vmem [resolvable:$true] %s521
          %524 = dma.hbm_to_vmem [thread:$0]  %s519, 128, %s522, %s510
        $region52: #{tpu_custom_call.1} parent=47 // pred_fallthru
          _
        // Predicated region
        $region53: #{tpu_custom_call.1} parent=47 // pred_check
          %p525 = pneg %p99
        $region54: #{tpu_custom_call.1} parent=47 // pred_check_branch
          %527 = sbr.rel (%p525) target = $region56
        $region55: #{tpu_custom_call.1} parent=47 // pred_region
          %s528 = sand.u32 %s39, 1
          %s529 = scalar_lea.sflag [#allocation9], %s528
          %s530 = sand.u32 %s89, 1
          %s531 = smul.addr %s530, 8
          %s532 = scalar_lea.vmem [#allocation8], %s531
          %s534 = ssub.s32 128, 128
          %535 = vsyncadd %s529, %s534
          %s536 = smul.addr %s46, 128
          %s537 = scalar_lea.hbm %s1, %s536
          %s539 = sshll.u32 %s532, 4
          %s540 = int_to_ptr.vmem [resolvable:$true] %s539
          %542 = dma.hbm_to_vmem [thread:$0]  %s537, 128, %s540, %s529
        $region56: #{tpu_custom_call.1} parent=47 // pred_fallthru
          _
        // Predicated region
        $region57: #{tpu_custom_call.1} parent=47 // pred_check
          %p543 = pneg %p125
        $region58: #{tpu_custom_call.1} parent=47 // pred_check_branch
          %545 = sbr.rel (%p543) target = $region60
        $region59: #{tpu_custom_call.1} parent=47 // pred_region
          %s546 = sand.u32 %s39, 1
          %s547 = scalar_lea.sflag [#allocation9], %s546
          %s548 = sand.u32 %s115, 1
          %s549 = smul.addr %s548, 8
          %s550 = scalar_lea.vmem [#allocation10], %s549
          %s552 = ssub.s32 128, 128
          %553 = vsyncadd %s547, %s552
          %s554 = smul.addr %s46, 128
          %s555 = scalar_lea.hbm %s2, %s554
          %s557 = sshll.u32 %s550, 4
          %s558 = int_to_ptr.vmem [resolvable:$true] %s557
          %560 = dma.hbm_to_vmem [thread:$0]  %s555, 128, %s558, %s547
        $region60: #{tpu_custom_call.1} parent=47 // pred_fallthru
          _
        // Predicated region
        $region61: #{tpu_custom_call.1} parent=47 // pred_check
          %p561 = pneg %p151
        $region62: #{tpu_custom_call.1} parent=47 // pred_check_branch
          %563 = sbr.rel (%p561) target = $region64
        $region63: #{tpu_custom_call.1} parent=47 // pred_region
          %p564 = scmp.lt.s32.totalorder %s46, 1
          %s565 = scalar_select %p564, %s46, 1
          %s566 = scalar_lea.vmem %s3, %s565
        $region64: #{tpu_custom_call.1} parent=47 // pred_fallthru
          _
      $region48: #{tpu_custom_call.1} parent=5 // pred_fallthru
        _
      %p567 = scmp.le.s32.totalorder 1, %s39
      %p568 = scmp.lt.s32.totalorder %s39, 3
      %p569 = pnand %p567, %p568
      %p570 = pneg %p569
      // Predicated region
      $region65: #{tpu_custom_call.1} parent=5 // pred_check
        _
      $region66: #{tpu_custom_call.1} parent=5 // pred_check_branch
        %572 = sbr.rel (%p569) target = $region68
      $region67: #{tpu_custom_call.1} parent=5 // pred_region
        %s573 = ssub.s32 %s39, 1
        %s574 = sand.u32 %s66, 1
        %s575 = scalar_lea.sflag [#allocation6], %s574
        %s576 = sand.u32 %s66, 1
        %s577 = smul.addr %s576, 8
        %s578 = scalar_lea.vmem [#allocation5], %s577
        // Predicated region
        $region69: #{tpu_custom_call.1} parent=67 // pred_check
          %p579 = pneg %p79
        $region70: #{tpu_custom_call.1} parent=67 // pred_check_branch
          %581 = sbr.rel (%p579) target = $region72
        $region71: #{tpu_custom_call.1} parent=67 // pred_region
          %582 = dma.done %s575, 128
        $region72: #{tpu_custom_call.1} parent=67 // pred_fallthru
          _
        %s583 = sand.u32 %s44, 1
        %s584 = scalar_lea.sflag [#allocation9], %s583
        %s585 = sand.u32 %s92, 1
        %s586 = smul.addr %s585, 8
        %s587 = scalar_lea.vmem [#allocation8], %s586
        // Predicated region
        $region73: #{tpu_custom_call.1} parent=67 // pred_check
          %p588 = pneg %p105
        $region74: #{tpu_custom_call.1} parent=67 // pred_check_branch
          %590 = sbr.rel (%p588) target = $region76
        $region75: #{tpu_custom_call.1} parent=67 // pred_region
          %591 = dma.done %s584, 128
        $region76: #{tpu_custom_call.1} parent=67 // pred_fallthru
          _
        %s592 = sand.u32 %s44, 1
        %s593 = scalar_lea.sflag [#allocation9], %s592
        %s594 = sand.u32 %s118, 1
        %s595 = smul.addr %s594, 8
        %s596 = scalar_lea.vmem [#allocation10], %s595
        // Predicated region
        $region77: #{tpu_custom_call.1} parent=67 // pred_check
          %p597 = pneg %p131
        $region78: #{tpu_custom_call.1} parent=67 // pred_check_branch
          %599 = sbr.rel (%p597) target = $region80
        $region79: #{tpu_custom_call.1} parent=67 // pred_region
          %600 = dma.done %s593, 128
        $region80: #{tpu_custom_call.1} parent=67 // pred_fallthru
          _
        // Predicated region
        $region81: #{tpu_custom_call.1} parent=67 // pred_check
          %p601 = pneg %p178
        $region82: #{tpu_custom_call.1} parent=67 // pred_check_branch
          %603 = sbr.rel (%p601) target = $region84
        $region83: #{tpu_custom_call.1} parent=67 // pred_region
          %604 = dma.done [#allocation12], 512
        $region84: #{tpu_custom_call.1} parent=67 // pred_fallthru
          _
        // Predicated region
        $region85: #{tpu_custom_call.1} parent=67 // pred_check
          %p605 = pneg %p220
        $region86: #{tpu_custom_call.1} parent=67 // pred_check_branch
          %607 = sbr.rel (%p605) target = $region88
        $region87: #{tpu_custom_call.1} parent=67 // pred_region
          %608 = dma.done [#allocation12], 512
        $region88: #{tpu_custom_call.1} parent=67 // pred_fallthru
          _
        // Predicated region
        $region89: #{tpu_custom_call.1} parent=67 // pred_check
          %p609 = pneg %p262
        $region90: #{tpu_custom_call.1} parent=67 // pred_check_branch
          %611 = sbr.rel (%p609) target = $region92
        $region91: #{tpu_custom_call.1} parent=67 // pred_region
          %612 = dma.done [#allocation15], 512
        $region92: #{tpu_custom_call.1} parent=67 // pred_fallthru
          _
        %s613 = sand.u32 %s66, 1
        %s614 = scalar_lea.sflag [#allocation6], %s613
        %s615 = sand.u32 %s66, 1
        %s616 = smul.addr %s615, 8
        %s617 = scalar_lea.vmem [#allocation5], %s616
        %p618 = pneg %p79
        %p619 = pneg %p76
        %s620 = sand.u32 %s44, 1
        %s621 = scalar_lea.sflag [#allocation9], %s620
        %s622 = sand.u32 %s92, 1
        %s623 = smul.addr %s622, 8
        %s624 = scalar_lea.vmem [#allocation8], %s623
        %p625 = pneg %p105
        %p626 = pneg %p102
        %s627 = sand.u32 %s44, 1
        %s628 = scalar_lea.sflag [#allocation9], %s627
        %s629 = sand.u32 %s118, 1
        %s630 = smul.addr %s629, 8
        %s631 = scalar_lea.vmem [#allocation10], %s630
        %p632 = pneg %p131
        %p633 = pneg %p128
        %p634 = scmp.lt.s32.totalorder %s48, 1
        %s635 = scalar_select %p634, %s48, 1
        %s636 = scalar_lea.vmem %s3, %s635
        %p637 = pneg %p157
        %p638 = pneg %p154
        %p639 = pneg %p178
        %p640 = pneg %p175
        %p641 = pneg %p199
        %p642 = pneg %p196
        %p643 = pneg %p220
        %p644 = pneg %p217
        %p645 = pneg %p241
        %p646 = pneg %p238
        %p647 = pneg %p262
        %p648 = pneg %p259
        %p649 = pneg %p283
        %p650 = pneg %p280
        %p651 = pneg %p304
        %p652 = pneg %p301
        %p653 = pneg %p325
        %p654 = pneg %p322
        %p655 = pneg %p353
        %p656 = pneg %p350
        %s657 = sand.u32 %s340, 1
        %s658 = scalar_lea.sflag [#allocation7], %s657
        %s659 = sand.u32 %s340, 1
        %s660 = smul.addr %s659, 8
        %s661 = scalar_lea.vmem [#allocation16], %s660
        %p662 = pneg %p381
        %p663 = pneg %p378
        %s664 = sand.u32 %s44, 1
        %s665 = scalar_lea.sflag [#allocation18], %s664
        %s666 = sand.u32 %s368, 1
        %s667 = smul.addr %s666, 32
        %s668 = scalar_lea.vmem [#allocation17], %s667
        %p669 = pneg %p407
        %p670 = pneg %p404
        %s671 = sand.u32 %s44, 1
        %s672 = scalar_lea.sflag [#allocation18], %s671
        %s673 = sand.u32 %s394, 1
        %s674 = smul.addr %s673, 32
        %s675 = scalar_lea.vmem [#allocation19], %s674
        %p676 = pneg %p433
        %p677 = pneg %p430
        %s678 = sand.u32 %s420, 1
        %s679 = scalar_lea.sflag [#allocation21], %s678
        %s680 = sand.u32 %s420, 1
        %s681 = smul.addr %s680, 32
        %s682 = scalar_lea.vmem [#allocation20], %s681
        %p683 = scmp.lt.s32.totalorder %s48, 1
        %s684 = scalar_select %p683, %s48, 1
        %s685 = scalar_lea.vmem %s3, %s684
        %p686 = scmp.eq.s32.totalorder %s49, 0
        // Predicated region
        $region93: #{tpu_custom_call.1} parent=67 // pred_check
          %p687 = pneg %p686
        $region94: #{tpu_custom_call.1} parent=67 // pred_check_branch
          %689 = sbr.rel (%p687) target = $region96
        $region95: #{tpu_custom_call.1} parent=67 // pred_region
          %v690 = vld [vmem:[%s587] sm:$0xff]
          %v691 = vld [vmem:[%s596] sm:$0xff]
          %v692 = vld [vmem:[#allocation13] sm:$0xff]
          %v693 = vld [vmem:[#allocation13 + $0x8] sm:$0xff]
          %v694 = vld [vmem:[#allocation13 + $0x10] sm:$0xff]
          %v695 = vld [vmem:[#allocation13 + $0x18] sm:$0xff]
          %v696 = vld [vmem:[%s7] sm:$0x1]
          %v698 = vlaneseq
          %v699 = vshrl.u32 %v698, 7
          %v700 = vsub.s32 0, %v699
          %v701 = vrot.slane %v696, %v700
          %vm703 = vcmask 261120
          %v705 = vsel %vm703, %v690, 0
          %707 = vmatprep.subr.mxu0 0.0
          %708 = vmatpush1.msra.mxu0 %v692
          %709 = vmatprep.subr.mxu0 0.0
          %710 = vmatpush1.msra.mxu0 %v693
          %711 = vmatprep.subr.mxu0 0.0
          %712 = vmatpush1.msra.mxu0 %v694
          %713 = vmatprep.subr.mxu0 0.0
          %714 = vmatpush1.msra.mxu0 %v695
          %715 = vmatprep.subr.mxu0 0.0
          %716 = vmatpush1.msra.mxu0 0.0
          %717 = vmatprep.subr.mxu0 0.0
          %718 = vmatpush1.msra.mxu0 0.0
          %719 = vmatprep.subr.mxu0 0.0
          %720 = vmatpush1.msra.mxu0 0.0
          %721 = vmatprep.subr.mxu0 0.0
          %722 = vmatpush1.msra.mxu0 0.0
          %723 = vmatprep.subr.mxu0 0.0
          %724 = vmatpush1.msra.mxu0 0.0
          %725 = vmatprep.subr.mxu0 0.0
          %726 = vmatpush1.msra.mxu0 0.0
          %727 = vmatprep.subr.mxu0 0.0
          %728 = vmatpush1.msra.mxu0 0.0
          %729 = vmatprep.subr.mxu0 0.0
          %730 = vmatpush1.msra.mxu0 0.0
          %731 = vmatprep.subr.mxu0 0.0
          %732 = vmatpush1.msra.mxu0 0.0
          %733 = vmatprep.subr.mxu0 0.0
          %734 = vmatpush1.msra.mxu0 0.0
          %735 = vmatprep.subr.mxu0 0.0
          %736 = vmatpush1.msra.mxu0 0.0
          %737 = vmatprep.subr.mxu0 0.0
          %738 = vmatpush1.msra.mxu0 0.0
          %739 = vmatprep.subr.mxu0 0.0
          %740 = vmatpush1.msra.mxu0 0.0
          %741 = vmatprep.subr.mxu0 0.0
          %742 = vmatpush1.msra.mxu0 0.0
          %743 = vmatprep.subr.mxu0 0.0
          %744 = vmatpush1.msra.mxu0 0.0
          %745 = vmatprep.subr.mxu0 0.0
          %746 = vmatpush1.msra.mxu0 0.0
          %747 = vmatprep.subr.mxu0 0.0
          %748 = vmatpush1.msra.mxu0 0.0
          %749 = vmatprep.subr.mxu0 0.0
          %750 = vmatpush1.msra.mxu0 0.0
          %751 = vmatprep.subr.mxu0 0.0
          %752 = vmatpush1.msra.mxu0 0.0
          %753 = vmatprep.subr.mxu0 0.0
          %754 = vmatpush1.msra.mxu0 0.0
          %755 = vmatprep.subr.mxu0 0.0
          %756 = vmatpush1.msra.mxu0 0.0
          %757 = vmatprep.subr.mxu0 0.0
          %758 = vmatpush1.msra.mxu0 0.0
          %759 = vmatprep.subr.mxu0 0.0
          %760 = vmatpush1.msra.mxu0 0.0
          %761 = vmatprep.subr.mxu0 0.0
          %762 = vmatpush1.msra.mxu0 0.0
          %763 = vmatprep.subr.mxu0 0.0
          %764 = vmatpush1.msra.mxu0 0.0
          %765 = vmatprep.subr.mxu0 0.0
          %766 = vmatpush1.msra.mxu0 0.0
          %767 = vmatprep.subr.mxu0 0.0
          %768 = vmatpush1.msra.mxu0 0.0
          %769 = vmatprep.subr.mxu0 0.0
          %770 = vmatpush1.msra.mxu0 0.0
          %771 = vmatprep.mubr.f32.mxu0 0.0
          %772 = vmatmul.mubr.f32.gmra.mrb[0].mxu0 %v705
          %v773 = vpop.f32.mrb[0].mxu0
          %v774 = vadd.f32 %v701, %v773
          %v775 = vpop.f32.mrb[0].mxu0
          %776 = vdwg.mxu0
          %v777 = vld [vmem:[#allocation14] sm:$0xff]
          %v778 = vld [vmem:[#allocation14 + $0x8] sm:$0xff]
          %v779 = vld [vmem:[#allocation14 + $0x10] sm:$0xff]
          %v780 = vld [vmem:[#allocation14 + $0x18] sm:$0xff]
          %v781 = vld [vmem:[%s9] sm:$0x1]
          %v783 = vlaneseq
          %v784 = vshrl.u32 %v783, 7
          %v785 = vsub.s32 0, %v784
          %v786 = vrot.slane %v781, %v785
          %v789 = vsel %vm703, %v691, 0
          %791 = vmatprep.subr.mxu0 0.0
          %792 = vmatpush1.msra.mxu0 %v777
          %793 = vmatprep.subr.mxu0 0.0
          %794 = vmatpush1.msra.mxu0 %v778
          %795 = vmatprep.subr.mxu0 0.0
          %796 = vmatpush1.msra.mxu0 %v779
          %797 = vmatprep.subr.mxu0 0.0
          %798 = vmatpush1.msra.mxu0 %v780
          %799 = vmatprep.subr.mxu0 0.0
          %800 = vmatpush1.msra.mxu0 0.0
          %801 = vmatprep.subr.mxu0 0.0
          %802 = vmatpush1.msra.mxu0 0.0
          %803 = vmatprep.subr.mxu0 0.0
          %804 = vmatpush1.msra.mxu0 0.0
          %805 = vmatprep.subr.mxu0 0.0
          %806 = vmatpush1.msra.mxu0 0.0
          %807 = vmatprep.subr.mxu0 0.0
          %808 = vmatpush1.msra.mxu0 0.0
          %809 = vmatprep.subr.mxu0 0.0
          %810 = vmatpush1.msra.mxu0 0.0
          %811 = vmatprep.subr.mxu0 0.0
          %812 = vmatpush1.msra.mxu0 0.0
          %813 = vmatprep.subr.mxu0 0.0
          %814 = vmatpush1.msra.mxu0 0.0
          %815 = vmatprep.subr.mxu0 0.0
          %816 = vmatpush1.msra.mxu0 0.0
          %817 = vmatprep.subr.mxu0 0.0
          %818 = vmatpush1.msra.mxu0 0.0
          %819 = vmatprep.subr.mxu0 0.0
          %820 = vmatpush1.msra.mxu0 0.0
          %821 = vmatprep.subr.mxu0 0.0
          %822 = vmatpush1.msra.mxu0 0.0
          %823 = vmatprep.subr.mxu0 0.0
          %824 = vmatpush1.msra.mxu0 0.0
          %825 = vmatprep.subr.mxu0 0.0
          %826 = vmatpush1.msra.mxu0 0.0
          %827 = vmatprep.subr.mxu0 0.0
          %828 = vmatpush1.msra.mxu0 0.0
          %829 = vmatprep.subr.mxu0 0.0
          %830 = vmatpush1.msra.mxu0 0.0
          %831 = vmatprep.subr.mxu0 0.0
          %832 = vmatpush1.msra.mxu0 0.0
          %833 = vmatprep.subr.mxu0 0.0
          %834 = vmatpush1.msra.mxu0 0.0
          %835 = vmatprep.subr.mxu0 0.0
          %836 = vmatpush1.msra.mxu0 0.0
          %837 = vmatprep.subr.mxu0 0.0
          %838 = vmatpush1.msra.mxu0 0.0
          %839 = vmatprep.subr.mxu0 0.0
          %840 = vmatpush1.msra.mxu0 0.0
          %841 = vmatprep.subr.mxu0 0.0
          %842 = vmatpush1.msra.mxu0 0.0
          %843 = vmatprep.subr.mxu0 0.0
          %844 = vmatpush1.msra.mxu0 0.0
          %845 = vmatprep.subr.mxu0 0.0
          %846 = vmatpush1.msra.mxu0 0.0
          %847 = vmatprep.subr.mxu0 0.0
          %848 = vmatpush1.msra.mxu0 0.0
          %849 = vmatprep.subr.mxu0 0.0
          %850 = vmatpush1.msra.mxu0 0.0
          %851 = vmatprep.subr.mxu0 0.0
          %852 = vmatpush1.msra.mxu0 0.0
          %853 = vmatprep.subr.mxu0 0.0
          %854 = vmatpush1.msra.mxu0 0.0
          %855 = vmatprep.mubr.f32.mxu0 0.0
          %856 = vmatmul.mubr.f32.gmra.mrb[0].mxu0 %v789
          %v857 = vpop.f32.mrb[0].mxu0
          %v858 = vadd.f32 %v786, %v857
          %v859 = vpop.f32.mrb[0].mxu0
          %860 = vdwg.mxu0
          %862 = vrot.lane.b32.xlu0 %v774, 120
          %v863 = vpop.permute.xlu0 %862
          %865 = vrot.lane.b32.xlu0 %v774, 112
          %v866 = vpop.permute.xlu0 %865
          %868 = vrot.lane.b32.xlu0 %v774, 104
          %v869 = vpop.permute.xlu0 %868
          %v871 = vcombine.low %v774, %v866
          %v872 = vcombine.high %v774, %v866
          %v874 = vunpack.c.l.s4 1983009808
          %v875 = vunpack.c.0.s8 %v874
          %v876 = vlaneseq
          %v877 = vshrl.u32 %v876, 7
          %v878 = vsub.s32 %v875, %v877
          %v879 = vrot.slane %v871, %v878
          %v881 = vunpack.c.l.s4 1983009808
          %v882 = vunpack.c.0.s8 %v881
          %v883 = vlaneseq
          %v884 = vshrl.u32 %v883, 7
          %v885 = vsub.s32 %v882, %v884
          %v886 = vrot.slane %v872, %v885
          %v887 = vcombine.low %v863, %v869
          %v888 = vcombine.high %v863, %v869
          %v890 = vunpack.c.l.s4 1983009808
          %v891 = vunpack.c.0.s8 %v890
          %v892 = vlaneseq
          %v893 = vshrl.u32 %v892, 7
          %v894 = vsub.s32 %v891, %v893
          %v895 = vrot.slane %v887, %v894
          %v897 = vunpack.c.l.s4 1983009808
          %v898 = vunpack.c.0.s8 %v897
          %v899 = vlaneseq
          %v900 = vshrl.u32 %v899, 7
          %v901 = vsub.s32 %v898, %v900
          %v902 = vrot.slane %v888, %v901
          %v903 = vcombine.low %v879, %v895
          %v904 = vcombine.high %v879, %v895
          %v906 = vunpack.c.l.s4 1934713408
          %v907 = vunpack.c.0.s8 %v906
          %v908 = vlaneseq
          %v909 = vshrl.u32 %v908, 7
          %v910 = vsub.s32 %v907, %v909
          %v911 = vrot.slane %v903, %v910
          %v913 = vunpack.c.l.s4 1934713408
          %v914 = vunpack.c.0.s8 %v913
          %v915 = vlaneseq
          %v916 = vshrl.u32 %v915, 7
          %v917 = vsub.s32 %v914, %v916
          %v918 = vrot.slane %v904, %v917
          %v919 = vcombine.low %v886, %v902
          %v920 = vcombine.high %v886, %v902
          %v922 = vunpack.c.l.s4 1934713408
          %v923 = vunpack.c.0.s8 %v922
          %v924 = vlaneseq
          %v925 = vshrl.u32 %v924, 7
          %v926 = vsub.s32 %v923, %v925
          %v927 = vrot.slane %v919, %v926
          %v929 = vunpack.c.l.s4 1934713408
          %v930 = vunpack.c.0.s8 %v929
          %v931 = vlaneseq
          %v932 = vshrl.u32 %v931, 7
          %v933 = vsub.s32 %v930, %v932
          %v934 = vrot.slane %v920, %v933
          %v935 = vcombine.high %v911, 0.0
          %v936 = vcombine.high %v918, 0.0
          %v937 = vcombine.high %v927, 0.0
          %v938 = vcombine.high %v934, 0.0
          %v939 = vcombine.low %v911, %v918
          %v941 = vunpack.c.l.s4 1983009808
          %v942 = vunpack.c.0.s8 %v941
          %v943 = vlaneseq
          %v944 = vshrl.u32 %v943, 7
          %v945 = vsub.s32 %v942, %v944
          %v946 = vrot.slane %v939, %v945
          %v947 = vcombine.low %v935, %v936
          %v949 = vunpack.c.l.s4 1983009808
          %v950 = vunpack.c.0.s8 %v949
          %v951 = vlaneseq
          %v952 = vshrl.u32 %v951, 7
          %v953 = vsub.s32 %v950, %v952
          %v954 = vrot.slane %v947, %v953
          %v955 = vcombine.low %v927, %v934
          %v957 = vunpack.c.l.s4 1983009808
          %v958 = vunpack.c.0.s8 %v957
          %v959 = vlaneseq
          %v960 = vshrl.u32 %v959, 7
          %v961 = vsub.s32 %v958, %v960
          %v962 = vrot.slane %v955, %v961
          %v963 = vcombine.low %v937, %v938
          %v965 = vunpack.c.l.s4 1983009808
          %v966 = vunpack.c.0.s8 %v965
          %v967 = vlaneseq
          %v968 = vshrl.u32 %v967, 7
          %v969 = vsub.s32 %v966, %v968
          %v970 = vrot.slane %v963, %v969
          %v971 = vcombine.low %v946, %v954
          %v972 = vcombine.high %v946, %v954
          %v974 = vunpack.c.l.s4 1934713408
          %v975 = vunpack.c.0.s8 %v974
          %v976 = vlaneseq
          %v977 = vshrl.u32 %v976, 7
          %v978 = vsub.s32 %v975, %v977
          %v979 = vrot.slane %v971, %v978
          %v981 = vunpack.c.l.s4 1934713408
          %v982 = vunpack.c.0.s8 %v981
          %v983 = vlaneseq
          %v984 = vshrl.u32 %v983, 7
          %v985 = vsub.s32 %v982, %v984
          %v986 = vrot.slane %v972, %v985
          %v987 = vcombine.low %v962, %v970
          %v988 = vcombine.high %v962, %v970
          %v990 = vunpack.c.l.s4 1934713408
          %v991 = vunpack.c.0.s8 %v990
          %v992 = vlaneseq
          %v993 = vshrl.u32 %v992, 7
          %v994 = vsub.s32 %v991, %v993
          %v995 = vrot.slane %v987, %v994
          %v997 = vunpack.c.l.s4 1934713408
          %v998 = vunpack.c.0.s8 %v997
          %v999 = vlaneseq
          %v1000 = vshrl.u32 %v999, 7
          %v1001 = vsub.s32 %v998, %v1000
          %v1002 = vrot.slane %v988, %v1001
          %v1003 = vcombine.low %v979, %v995
          %v1004 = vcombine.high %v979, %v995
          %v1005 = vcombine.low %v986, %v1002
          %v1006 = vcombine.high %v986, %v1002
          %1008 = vrot.lane.b32.xlu0 %v858, 120
          %v1009 = vpop.permute.xlu0 %1008
          %1011 = vrot.lane.b32.xlu0 %v858, 112
          %v1012 = vpop.permute.xlu0 %1011
          %1014 = vrot.lane.b32.xlu0 %v858, 104
          %v1015 = vpop.permute.xlu0 %1014
          %v1017 = vcombine.low %v858, %v1012
          %v1018 = vcombine.high %v858, %v1012
          %v1020 = vunpack.c.l.s4 1983009808
          %v1021 = vunpack.c.0.s8 %v1020
          %v1022 = vlaneseq
          %v1023 = vshrl.u32 %v1022, 7
          %v1024 = vsub.s32 %v1021, %v1023
          %v1025 = vrot.slane %v1017, %v1024
          %v1027 = vunpack.c.l.s4 1983009808
          %v1028 = vunpack.c.0.s8 %v1027
          %v1029 = vlaneseq
          %v1030 = vshrl.u32 %v1029, 7
          %v1031 = vsub.s32 %v1028, %v1030
          %v1032 = vrot.slane %v1018, %v1031
          %v1033 = vcombine.low %v1009, %v1015
          %v1034 = vcombine.high %v1009, %v1015
          %v1036 = vunpack.c.l.s4 1983009808
          %v1037 = vunpack.c.0.s8 %v1036
          %v1038 = vlaneseq
          %v1039 = vshrl.u32 %v1038, 7
          %v1040 = vsub.s32 %v1037, %v1039
          %v1041 = vrot.slane %v1033, %v1040
          %v1043 = vunpack.c.l.s4 1983009808
          %v1044 = vunpack.c.0.s8 %v1043
          %v1045 = vlaneseq
          %v1046 = vshrl.u32 %v1045, 7
          %v1047 = vsub.s32 %v1044, %v1046
          %v1048 = vrot.slane %v1034, %v1047
          %v1049 = vcombine.low %v1025, %v1041
          %v1050 = vcombine.high %v1025, %v1041
          %v1052 = vunpack.c.l.s4 1934713408
          %v1053 = vunpack.c.0.s8 %v1052
          %v1054 = vlaneseq
          %v1055 = vshrl.u32 %v1054, 7
          %v1056 = vsub.s32 %v1053, %v1055
          %v1057 = vrot.slane %v1049, %v1056
          %v1059 = vunpack.c.l.s4 1934713408
          %v1060 = vunpack.c.0.s8 %v1059
          %v1061 = vlaneseq
          %v1062 = vshrl.u32 %v1061, 7
          %v1063 = vsub.s32 %v1060, %v1062
          %v1064 = vrot.slane %v1050, %v1063
          %v1065 = vcombine.low %v1032, %v1048
          %v1066 = vcombine.high %v1032, %v1048
          %v1068 = vunpack.c.l.s4 1934713408
          %v1069 = vunpack.c.0.s8 %v1068
          %v1070 = vlaneseq
          %v1071 = vshrl.u32 %v1070, 7
          %v1072 = vsub.s32 %v1069, %v1071
          %v1073 = vrot.slane %v1065, %v1072
          %v1075 = vunpack.c.l.s4 1934713408
          %v1076 = vunpack.c.0.s8 %v1075
          %v1077 = vlaneseq
          %v1078 = vshrl.u32 %v1077, 7
          %v1079 = vsub.s32 %v1076, %v1078
          %v1080 = vrot.slane %v1066, %v1079
          %v1081 = vcombine.high %v1057, 0.0
          %v1082 = vcombine.high %v1064, 0.0
          %v1083 = vcombine.high %v1073, 0.0
          %v1084 = vcombine.high %v1080, 0.0
          %v1085 = vcombine.low %v1057, %v1064
          %v1087 = vunpack.c.l.s4 1983009808
          %v1088 = vunpack.c.0.s8 %v1087
          %v1089 = vlaneseq
          %v1090 = vshrl.u32 %v1089, 7
          %v1091 = vsub.s32 %v1088, %v1090
          %v1092 = vrot.slane %v1085, %v1091
          %v1093 = vcombine.low %v1081, %v1082
          %v1095 = vunpack.c.l.s4 1983009808
          %v1096 = vunpack.c.0.s8 %v1095
          %v1097 = vlaneseq
          %v1098 = vshrl.u32 %v1097, 7
          %v1099 = vsub.s32 %v1096, %v1098
          %v1100 = vrot.slane %v1093, %v1099
          %v1101 = vcombine.low %v1073, %v1080
          %v1103 = vunpack.c.l.s4 1983009808
          %v1104 = vunpack.c.0.s8 %v1103
          %v1105 = vlaneseq
          %v1106 = vshrl.u32 %v1105, 7
          %v1107 = vsub.s32 %v1104, %v1106
          %v1108 = vrot.slane %v1101, %v1107
          %v1109 = vcombine.low %v1083, %v1084
          %v1111 = vunpack.c.l.s4 1983009808
          %v1112 = vunpack.c.0.s8 %v1111
          %v1113 = vlaneseq
          %v1114 = vshrl.u32 %v1113, 7
          %v1115 = vsub.s32 %v1112, %v1114
          %v1116 = vrot.slane %v1109, %v1115
          %v1117 = vcombine.low %v1092, %v1100
          %v1118 = vcombine.high %v1092, %v1100
          %v1120 = vunpack.c.l.s4 1934713408
          %v1121 = vunpack.c.0.s8 %v1120
          %v1122 = vlaneseq
          %v1123 = vshrl.u32 %v1122, 7
          %v1124 = vsub.s32 %v1121, %v1123
          %v1125 = vrot.slane %v1117, %v1124
          %v1127 = vunpack.c.l.s4 1934713408
          %v1128 = vunpack.c.0.s8 %v1127
          %v1129 = vlaneseq
          %v1130 = vshrl.u32 %v1129, 7
          %v1131 = vsub.s32 %v1128, %v1130
          %v1132 = vrot.slane %v1118, %v1131
          %v1133 = vcombine.low %v1108, %v1116
          %v1134 = vcombine.high %v1108, %v1116
          %v1136 = vunpack.c.l.s4 1934713408
          %v1137 = vunpack.c.0.s8 %v1136
          %v1138 = vlaneseq
          %v1139 = vshrl.u32 %v1138, 7
          %v1140 = vsub.s32 %v1137, %v1139
          %v1141 = vrot.slane %v1133, %v1140
          %v1143 = vunpack.c.l.s4 1934713408
          %v1144 = vunpack.c.0.s8 %v1143
          %v1145 = vlaneseq
          %v1146 = vshrl.u32 %v1145, 7
          %v1147 = vsub.s32 %v1144, %v1146
          %v1148 = vrot.slane %v1134, %v1147
          %v1149 = vcombine.low %v1125, %v1141
          %v1150 = vcombine.high %v1125, %v1141
          %v1151 = vcombine.low %v1132, %v1148
          %v1152 = vcombine.high %v1132, %v1148
          %vm1153 = vcmask 64512
          %1154 = vst.msk [vmem:[#allocation2] sm:$0xff] %vm1153, %v1003
          %1155 = vst.msk [vmem:[#allocation2 + $0x8] sm:$0xff] %vm1153, %v1004
          %1156 = vst.msk [vmem:[#allocation2 + $0x10] sm:$0xff] %vm1153, %v1005
          %1157 = vst.msk [vmem:[#allocation2 + $0x18] sm:$0xff] %vm1153, %v1006
          %1158 = vst.msk [vmem:[#allocation3] sm:$0xff] %vm1153, %v1149
          %1159 = vst.msk [vmem:[#allocation3 + $0x8] sm:$0xff] %vm1153, %v1150
          %1160 = vst.msk [vmem:[#allocation3 + $0x10] sm:$0xff] %vm1153, %v1151
          %1161 = vst.msk [vmem:[#allocation3 + $0x18] sm:$0xff] %vm1153, %v1152
          %1162 = vst.msk [vmem:[%s675] sm:$0xff] %vm1153, %v1003
          %1163 = vst.msk [vmem:[%s675 + $0x8] sm:$0xff] %vm1153, %v1004
          %1164 = vst.msk [vmem:[%s675 + $0x10] sm:$0xff] %vm1153, %v1005
          %1165 = vst.msk [vmem:[%s675 + $0x18] sm:$0xff] %vm1153, %v1006
          %1166 = vst.msk [vmem:[%s682] sm:$0xff] %vm1153, %v1149
          %1167 = vst.msk [vmem:[%s682 + $0x8] sm:$0xff] %vm1153, %v1150
          %1168 = vst.msk [vmem:[%s682 + $0x10] sm:$0xff] %vm1153, %v1151
          %1169 = vst.msk [vmem:[%s682 + $0x18] sm:$0xff] %vm1153, %v1152
          %v1170 = vld [vmem:[%s685] sm:$0x1]
          %vm1171 = vcmp.eq.s32.totalorder %v1170, 0
          %v1172 = vsel %vm1171, -1e+20, 0.0
          %vm1173 = vcmask 57344
          %1174 = vst.msk [vmem:[#allocation4] sm:$0x1] %vm1173, %v1172
        $region96: #{tpu_custom_call.1} parent=67 // pred_fallthru
          _
        %v1175 = vld [vmem:[%s578] sm:$0xff]
        %v1176 = vld [vmem:[#allocation11] sm:$0xff]
        %v1177 = vld [vmem:[#allocation11 + $0x8] sm:$0xff]
        %v1178 = vld [vmem:[#allocation11 + $0x10] sm:$0xff]
        %v1179 = vld [vmem:[#allocation11 + $0x18] sm:$0xff]
        %v1180 = vld [vmem:[%s5] sm:$0x1]
        %v1182 = vlaneseq
        %v1183 = vshrl.u32 %v1182, 7
        %v1184 = vsub.s32 0, %v1183
        %v1185 = vrot.slane %v1180, %v1184
        %vm1187 = vcmask 261120
        %v1189 = vsel %vm1187, %v1175, 0
        %1191 = vmatprep.subr.mxu0 0.0
        %1192 = vmatpush1.msra.mxu0 %v1176
        %1193 = vmatprep.subr.mxu0 0.0
        %1194 = vmatpush1.msra.mxu0 %v1177
        %1195 = vmatprep.subr.mxu0 0.0
        %1196 = vmatpush1.msra.mxu0 %v1178
        %1197 = vmatprep.subr.mxu0 0.0
        %1198 = vmatpush1.msra.mxu0 %v1179
        %1199 = vmatprep.subr.mxu0 0.0
        %1200 = vmatpush1.msra.mxu0 0.0
        %1201 = vmatprep.subr.mxu0 0.0
        %1202 = vmatpush1.msra.mxu0 0.0
        %1203 = vmatprep.subr.mxu0 0.0
        %1204 = vmatpush1.msra.mxu0 0.0
        %1205 = vmatprep.subr.mxu0 0.0
        %1206 = vmatpush1.msra.mxu0 0.0
        %1207 = vmatprep.subr.mxu0 0.0
        %1208 = vmatpush1.msra.mxu0 0.0
        %1209 = vmatprep.subr.mxu0 0.0
        %1210 = vmatpush1.msra.mxu0 0.0
        %1211 = vmatprep.subr.mxu0 0.0
        %1212 = vmatpush1.msra.mxu0 0.0
        %1213 = vmatprep.subr.mxu0 0.0
        %1214 = vmatpush1.msra.mxu0 0.0
        %1215 = vmatprep.subr.mxu0 0.0
        %1216 = vmatpush1.msra.mxu0 0.0
        %1217 = vmatprep.subr.mxu0 0.0
        %1218 = vmatpush1.msra.mxu0 0.0
        %1219 = vmatprep.subr.mxu0 0.0
        %1220 = vmatpush1.msra.mxu0 0.0
        %1221 = vmatprep.subr.mxu0 0.0
        %1222 = vmatpush1.msra.mxu0 0.0
        %1223 = vmatprep.subr.mxu0 0.0
        %1224 = vmatpush1.msra.mxu0 0.0
        %1225 = vmatprep.subr.mxu0 0.0
        %1226 = vmatpush1.msra.mxu0 0.0
        %1227 = vmatprep.subr.mxu0 0.0
        %1228 = vmatpush1.msra.mxu0 0.0
        %1229 = vmatprep.subr.mxu0 0.0
        %1230 = vmatpush1.msra.mxu0 0.0
        %1231 = vmatprep.subr.mxu0 0.0
        %1232 = vmatpush1.msra.mxu0 0.0
        %1233 = vmatprep.subr.mxu0 0.0
        %1234 = vmatpush1.msra.mxu0 0.0
        %1235 = vmatprep.subr.mxu0 0.0
        %1236 = vmatpush1.msra.mxu0 0.0
        %1237 = vmatprep.subr.mxu0 0.0
        %1238 = vmatpush1.msra.mxu0 0.0
        %1239 = vmatprep.subr.mxu0 0.0
        %1240 = vmatpush1.msra.mxu0 0.0
        %1241 = vmatprep.subr.mxu0 0.0
        %1242 = vmatpush1.msra.mxu0 0.0
        %1243 = vmatprep.subr.mxu0 0.0
        %1244 = vmatpush1.msra.mxu0 0.0
        %1245 = vmatprep.subr.mxu0 0.0
        %1246 = vmatpush1.msra.mxu0 0.0
        %1247 = vmatprep.subr.mxu0 0.0
        %1248 = vmatpush1.msra.mxu0 0.0
        %1249 = vmatprep.subr.mxu0 0.0
        %1250 = vmatpush1.msra.mxu0 0.0
        %1251 = vmatprep.subr.mxu0 0.0
        %1252 = vmatpush1.msra.mxu0 0.0
        %1253 = vmatprep.subr.mxu0 0.0
        %1254 = vmatpush1.msra.mxu0 0.0
        %1255 = vmatprep.mubr.f32.mxu0 0.0
        %1256 = vmatmul.mubr.f32.gmra.mrb[0].mxu0 %v1189
        %v1257 = vpop.f32.mrb[0].mxu0
        %v1258 = vadd.f32 %v1185, %v1257
        %v1259 = vpop.f32.mrb[0].mxu0
        %1260 = vdwg.mxu0
        %1262 = vrot.lane.b32.xlu0 %v1258, 120
        %v1263 = vpop.permute.xlu0 %1262
        %1265 = vrot.lane.b32.xlu0 %v1258, 112
        %v1266 = vpop.permute.xlu0 %1265
        %1268 = vrot.lane.b32.xlu0 %v1258, 104
        %v1269 = vpop.permute.xlu0 %1268
        %v1271 = vcombine.low %v1258, %v1266
        %v1272 = vcombine.high %v1258, %v1266
        %v1274 = vunpack.c.l.s4 1983009808
        %v1275 = vunpack.c.0.s8 %v1274
        %v1276 = vlaneseq
        %v1277 = vshrl.u32 %v1276, 7
        %v1278 = vsub.s32 %v1275, %v1277
        %v1279 = vrot.slane %v1271, %v1278
        %v1281 = vunpack.c.l.s4 1983009808
        %v1282 = vunpack.c.0.s8 %v1281
        %v1283 = vlaneseq
        %v1284 = vshrl.u32 %v1283, 7
        %v1285 = vsub.s32 %v1282, %v1284
        %v1286 = vrot.slane %v1272, %v1285
        %v1287 = vcombine.low %v1263, %v1269
        %v1288 = vcombine.high %v1263, %v1269
        %v1290 = vunpack.c.l.s4 1983009808
        %v1291 = vunpack.c.0.s8 %v1290
        %v1292 = vlaneseq
        %v1293 = vshrl.u32 %v1292, 7
        %v1294 = vsub.s32 %v1291, %v1293
        %v1295 = vrot.slane %v1287, %v1294
        %v1297 = vunpack.c.l.s4 1983009808
        %v1298 = vunpack.c.0.s8 %v1297
        %v1299 = vlaneseq
        %v1300 = vshrl.u32 %v1299, 7
        %v1301 = vsub.s32 %v1298, %v1300
        %v1302 = vrot.slane %v1288, %v1301
        %v1303 = vcombine.low %v1279, %v1295
        %v1304 = vcombine.high %v1279, %v1295
        %v1306 = vunpack.c.l.s4 1934713408
        %v1307 = vunpack.c.0.s8 %v1306
        %v1308 = vlaneseq
        %v1309 = vshrl.u32 %v1308, 7
        %v1310 = vsub.s32 %v1307, %v1309
        %v1311 = vrot.slane %v1303, %v1310
        %v1313 = vunpack.c.l.s4 1934713408
        %v1314 = vunpack.c.0.s8 %v1313
        %v1315 = vlaneseq
        %v1316 = vshrl.u32 %v1315, 7
        %v1317 = vsub.s32 %v1314, %v1316
        %v1318 = vrot.slane %v1304, %v1317
        %v1319 = vcombine.low %v1286, %v1302
        %v1320 = vcombine.high %v1286, %v1302
        %v1322 = vunpack.c.l.s4 1934713408
        %v1323 = vunpack.c.0.s8 %v1322
        %v1324 = vlaneseq
        %v1325 = vshrl.u32 %v1324, 7
        %v1326 = vsub.s32 %v1323, %v1325
        %v1327 = vrot.slane %v1319, %v1326
        %v1329 = vunpack.c.l.s4 1934713408
        %v1330 = vunpack.c.0.s8 %v1329
        %v1331 = vlaneseq
        %v1332 = vshrl.u32 %v1331, 7
        %v1333 = vsub.s32 %v1330, %v1332
        %v1334 = vrot.slane %v1320, %v1333
        %v1335 = vcombine.high %v1311, 0.0
        %v1336 = vcombine.high %v1318, 0.0
        %v1337 = vcombine.high %v1327, 0.0
        %v1338 = vcombine.high %v1334, 0.0
        %v1339 = vcombine.low %v1311, %v1318
        %v1341 = vunpack.c.l.s4 1983009808
        %v1342 = vunpack.c.0.s8 %v1341
        %v1343 = vlaneseq
        %v1344 = vshrl.u32 %v1343, 7
        %v1345 = vsub.s32 %v1342, %v1344
        %v1346 = vrot.slane %v1339, %v1345
        %v1347 = vcombine.low %v1335, %v1336
        %v1349 = vunpack.c.l.s4 1983009808
        %v1350 = vunpack.c.0.s8 %v1349
        %v1351 = vlaneseq
        %v1352 = vshrl.u32 %v1351, 7
        %v1353 = vsub.s32 %v1350, %v1352
        %v1354 = vrot.slane %v1347, %v1353
        %v1355 = vcombine.low %v1327, %v1334
        %v1357 = vunpack.c.l.s4 1983009808
        %v1358 = vunpack.c.0.s8 %v1357
        %v1359 = vlaneseq
        %v1360 = vshrl.u32 %v1359, 7
        %v1361 = vsub.s32 %v1358, %v1360
        %v1362 = vrot.slane %v1355, %v1361
        %v1363 = vcombine.low %v1337, %v1338
        %v1365 = vunpack.c.l.s4 1983009808
        %v1366 = vunpack.c.0.s8 %v1365
        %v1367 = vlaneseq
        %v1368 = vshrl.u32 %v1367, 7
        %v1369 = vsub.s32 %v1366, %v1368
        %v1370 = vrot.slane %v1363, %v1369
        %v1371 = vcombine.low %v1346, %v1354
        %v1372 = vcombine.high %v1346, %v1354
        %v1374 = vunpack.c.l.s4 1934713408
        %v1375 = vunpack.c.0.s8 %v1374
        %v1376 = vlaneseq
        %v1377 = vshrl.u32 %v1376, 7
        %v1378 = vsub.s32 %v1375, %v1377
        %v1379 = vrot.slane %v1371, %v1378
        %v1381 = vunpack.c.l.s4 1934713408
        %v1382 = vunpack.c.0.s8 %v1381
        %v1383 = vlaneseq
        %v1384 = vshrl.u32 %v1383, 7
        %v1385 = vsub.s32 %v1382, %v1384
        %v1386 = vrot.slane %v1372, %v1385
        %v1387 = vcombine.low %v1362, %v1370
        %v1388 = vcombine.high %v1362, %v1370
        %v1390 = vunpack.c.l.s4 1934713408
        %v1391 = vunpack.c.0.s8 %v1390
        %v1392 = vlaneseq
        %v1393 = vshrl.u32 %v1392, 7
        %v1394 = vsub.s32 %v1391, %v1393
        %v1395 = vrot.slane %v1387, %v1394
        %v1397 = vunpack.c.l.s4 1934713408
        %v1398 = vunpack.c.0.s8 %v1397
        %v1399 = vlaneseq
        %v1400 = vshrl.u32 %v1399, 7
        %v1401 = vsub.s32 %v1398, %v1400
        %v1402 = vrot.slane %v1388, %v1401
        %v1403 = vcombine.low %v1379, %v1395
        %v1404 = vcombine.high %v1379, %v1395
        %v1405 = vcombine.low %v1386, %v1402
        %v1406 = vcombine.high %v1386, %v1402
        %v1407 = vld [vmem:[#allocation2] sm:$0xff]
        %v1408 = vld [vmem:[#allocation2 + $0x8] sm:$0xff]
        %v1409 = vld [vmem:[#allocation2 + $0x10] sm:$0xff]
        %v1410 = vld [vmem:[#allocation2 + $0x18] sm:$0xff]
        %v1411 = vld [vmem:[#allocation4] sm:$0x1]
        %v1413 = vlaneseq
        %v1414 = vshrl.u32 %v1413, 7
        %v1415 = vsub.s32 0, %v1414
        %v1416 = vrot.slane %v1411, %v1415
        %vm1418 = vcmask 64512
        %v1420 = vsel %vm1418, %v1403, 0
        %v1423 = vsel %vm1418, %v1407, 0
        %1425 = vmatprep.subr.mxu0 0.0
        %1426 = vmatpush1.xpose.msra.mxu0 %v1423
        %1427 = vmatprep.subr.mxu0 0.0
        %1428 = vmatpush1.xpose.msra.mxu0 0.0
        %1429 = vmatprep.subr.mxu0 0.0
        %1430 = vmatpush1.xpose.msra.mxu0 0.0
        %1431 = vmatprep.subr.mxu0 0.0
        %1432 = vmatpush1.xpose.msra.mxu0 0.0
        %1433 = vmatprep.subr.mxu0 0.0
        %1434 = vmatpush1.xpose.msra.mxu0 0.0
        %1435 = vmatprep.subr.mxu0 0.0
        %1436 = vmatpush1.xpose.msra.mxu0 0.0
        %1437 = vmatprep.subr.mxu0 0.0
        %1438 = vmatpush1.xpose.msra.mxu0 0.0
        %1439 = vmatprep.subr.mxu0 0.0
        %1440 = vmatpush1.xpose.msra.mxu0 0.0
        %1441 = vmatprep.subr.mxu0 0.0
        %1442 = vmatpush1.xpose.msra.mxu0 0.0
        %1443 = vmatprep.subr.mxu0 0.0
        %1444 = vmatpush1.xpose.msra.mxu0 0.0
        %1445 = vmatprep.subr.mxu0 0.0
        %1446 = vmatpush1.xpose.msra.mxu0 0.0
        %1447 = vmatprep.subr.mxu0 0.0
        %1448 = vmatpush1.xpose.msra.mxu0 0.0
        %1449 = vmatprep.subr.mxu0 0.0
        %1450 = vmatpush1.xpose.msra.mxu0 0.0
        %1451 = vmatprep.subr.mxu0 0.0
        %1452 = vmatpush1.xpose.msra.mxu0 0.0
        %1453 = vmatprep.subr.mxu0 0.0
        %1454 = vmatpush1.xpose.msra.mxu0 0.0
        %1455 = vmatprep.subr.mxu0 0.0
        %1456 = vmatpush1.xpose.msra.mxu0 0.0
        %1457 = vmatprep.subr.mxu0 0.0
        %1458 = vmatpush1.xpose.msra.mxu0 0.0
        %1459 = vmatprep.subr.mxu0 0.0
        %1460 = vmatpush1.xpose.msra.mxu0 0.0
        %1461 = vmatprep.subr.mxu0 0.0
        %1462 = vmatpush1.xpose.msra.mxu0 0.0
        %1463 = vmatprep.subr.mxu0 0.0
        %1464 = vmatpush1.xpose.msra.mxu0 0.0
        %1465 = vmatprep.subr.mxu0 0.0
        %1466 = vmatpush1.xpose.msra.mxu0 0.0
        %1467 = vmatprep.subr.mxu0 0.0
        %1468 = vmatpush1.xpose.msra.mxu0 0.0
        %1469 = vmatprep.subr.mxu0 0.0
        %1470 = vmatpush1.xpose.msra.mxu0 0.0
        %1471 = vmatprep.subr.mxu0 0.0
        %1472 = vmatpush1.xpose.msra.mxu0 0.0
        %1473 = vmatprep.subr.mxu0 0.0
        %1474 = vmatpush1.xpose.msra.mxu0 0.0
        %1475 = vmatprep.subr.mxu0 0.0
        %1476 = vmatpush1.xpose.msra.mxu0 0.0
        %1477 = vmatprep.subr.mxu0 0.0
        %1478 = vmatpush1.xpose.msra.mxu0 0.0
        %1479 = vmatprep.subr.mxu0 0.0
        %1480 = vmatpush1.xpose.msra.mxu0 0.0
        %1481 = vmatprep.subr.mxu0 0.0
        %1482 = vmatpush1.xpose.msra.mxu0 0.0
        %1483 = vmatprep.subr.mxu0 0.0
        %1484 = vmatpush1.xpose.msra.mxu0 0.0
        %1485 = vmatprep.subr.mxu0 0.0
        %1486 = vmatpush1.xpose.msra.mxu0 0.0
        %1487 = vmatprep.subr.mxu0 0.0
        %1488 = vmatpush1.xpose.msra.mxu0 0.0
        %1489 = vmatprep.mubr.f32.mxu0 0.0
        %1490 = vmatmul.mubr.f32.gmra.mrb[0].mxu0 %v1420
        %v1491 = vpop.f32.mrb[0].mxu0
        %v1492 = vadd.f32 %v1416, %v1491
        %v1493 = vpop.f32.mrb[0].mxu0
        %1494 = vdwg.mxu0
        %v1496 = vsel %vm1418, %v1404, 0
        %v1499 = vsel %vm1418, %v1408, 0
        %1501 = vmatprep.subr.mxu0 0.0
        %1502 = vmatpush1.xpose.msra.mxu0 %v1499
        %1503 = vmatprep.subr.mxu0 0.0
        %1504 = vmatpush1.xpose.msra.mxu0 0.0
        %1505 = vmatprep.subr.mxu0 0.0
        %1506 = vmatpush1.xpose.msra.mxu0 0.0
        %1507 = vmatprep.subr.mxu0 0.0
        %1508 = vmatpush1.xpose.msra.mxu0 0.0
        %1509 = vmatprep.subr.mxu0 0.0
        %1510 = vmatpush1.xpose.msra.mxu0 0.0
        %1511 = vmatprep.subr.mxu0 0.0
        %1512 = vmatpush1.xpose.msra.mxu0 0.0
        %1513 = vmatprep.subr.mxu0 0.0
        %1514 = vmatpush1.xpose.msra.mxu0 0.0
        %1515 = vmatprep.subr.mxu0 0.0
        %1516 = vmatpush1.xpose.msra.mxu0 0.0
        %1517 = vmatprep.subr.mxu0 0.0
        %1518 = vmatpush1.xpose.msra.mxu0 0.0
        %1519 = vmatprep.subr.mxu0 0.0
        %1520 = vmatpush1.xpose.msra.mxu0 0.0
        %1521 = vmatprep.subr.mxu0 0.0
        %1522 = vmatpush1.xpose.msra.mxu0 0.0
        %1523 = vmatprep.subr.mxu0 0.0
        %1524 = vmatpush1.xpose.msra.mxu0 0.0
        %1525 = vmatprep.subr.mxu0 0.0
        %1526 = vmatpush1.xpose.msra.mxu0 0.0
        %1527 = vmatprep.subr.mxu0 0.0
        %1528 = vmatpush1.xpose.msra.mxu0 0.0
        %1529 = vmatprep.subr.mxu0 0.0
        %1530 = vmatpush1.xpose.msra.mxu0 0.0
        %1531 = vmatprep.subr.mxu0 0.0
        %1532 = vmatpush1.xpose.msra.mxu0 0.0
        %1533 = vmatprep.subr.mxu0 0.0
        %1534 = vmatpush1.xpose.msra.mxu0 0.0
        %1535 = vmatprep.subr.mxu0 0.0
        %1536 = vmatpush1.xpose.msra.mxu0 0.0
        %1537 = vmatprep.subr.mxu0 0.0
        %1538 = vmatpush1.xpose.msra.mxu0 0.0
        %1539 = vmatprep.subr.mxu0 0.0
        %1540 = vmatpush1.xpose.msra.mxu0 0.0
        %1541 = vmatprep.subr.mxu0 0.0
        %1542 = vmatpush1.xpose.msra.mxu0 0.0
        %1543 = vmatprep.subr.mxu0 0.0
        %1544 = vmatpush1.xpose.msra.mxu0 0.0
        %1545 = vmatprep.subr.mxu0 0.0
        %1546 = vmatpush1.xpose.msra.mxu0 0.0
        %1547 = vmatprep.subr.mxu0 0.0
        %1548 = vmatpush1.xpose.msra.mxu0 0.0
        %1549 = vmatprep.subr.mxu0 0.0
        %1550 = vmatpush1.xpose.msra.mxu0 0.0
        %1551 = vmatprep.subr.mxu0 0.0
        %1552 = vmatpush1.xpose.msra.mxu0 0.0
        %1553 = vmatprep.subr.mxu0 0.0
        %1554 = vmatpush1.xpose.msra.mxu0 0.0
        %1555 = vmatprep.subr.mxu0 0.0
        %1556 = vmatpush1.xpose.msra.mxu0 0.0
        %1557 = vmatprep.subr.mxu0 0.0
        %1558 = vmatpush1.xpose.msra.mxu0 0.0
        %1559 = vmatprep.subr.mxu0 0.0
        %1560 = vmatpush1.xpose.msra.mxu0 0.0
        %1561 = vmatprep.subr.mxu0 0.0
        %1562 = vmatpush1.xpose.msra.mxu0 0.0
        %1563 = vmatprep.subr.mxu0 0.0
        %1564 = vmatpush1.xpose.msra.mxu0 0.0
        %1565 = vmatprep.mubr.f32.mxu0 0.0
        %1566 = vmatmul.mubr.f32.gmra.mrb[0].mxu0 %v1496
        %v1567 = vpop.f32.mrb[0].mxu0
        %v1568 = vadd.f32 %v1416, %v1567
        %v1569 = vpop.f32.mrb[0].mxu0
        %1570 = vdwg.mxu0
        %v1572 = vsel %vm1418, %v1405, 0
        %v1575 = vsel %vm1418, %v1409, 0
        %1577 = vmatprep.subr.mxu0 0.0
        %1578 = vmatpush1.xpose.msra.mxu0 %v1575
        %1579 = vmatprep.subr.mxu0 0.0
        %1580 = vmatpush1.xpose.msra.mxu0 0.0
        %1581 = vmatprep.subr.mxu0 0.0
        %1582 = vmatpush1.xpose.msra.mxu0 0.0
        %1583 = vmatprep.subr.mxu0 0.0
        %1584 = vmatpush1.xpose.msra.mxu0 0.0
        %1585 = vmatprep.subr.mxu0 0.0
        %1586 = vmatpush1.xpose.msra.mxu0 0.0
        %1587 = vmatprep.subr.mxu0 0.0
        %1588 = vmatpush1.xpose.msra.mxu0 0.0
        %1589 = vmatprep.subr.mxu0 0.0
        %1590 = vmatpush1.xpose.msra.mxu0 0.0
        %1591 = vmatprep.subr.mxu0 0.0
        %1592 = vmatpush1.xpose.msra.mxu0 0.0
        %1593 = vmatprep.subr.mxu0 0.0
        %1594 = vmatpush1.xpose.msra.mxu0 0.0
        %1595 = vmatprep.subr.mxu0 0.0
        %1596 = vmatpush1.xpose.msra.mxu0 0.0
        %1597 = vmatprep.subr.mxu0 0.0
        %1598 = vmatpush1.xpose.msra.mxu0 0.0
        %1599 = vmatprep.subr.mxu0 0.0
        %1600 = vmatpush1.xpose.msra.mxu0 0.0
        %1601 = vmatprep.subr.mxu0 0.0
        %1602 = vmatpush1.xpose.msra.mxu0 0.0
        %1603 = vmatprep.subr.mxu0 0.0
        %1604 = vmatpush1.xpose.msra.mxu0 0.0
        %1605 = vmatprep.subr.mxu0 0.0
        %1606 = vmatpush1.xpose.msra.mxu0 0.0
        %1607 = vmatprep.subr.mxu0 0.0
        %1608 = vmatpush1.xpose.msra.mxu0 0.0
        %1609 = vmatprep.subr.mxu0 0.0
        %1610 = vmatpush1.xpose.msra.mxu0 0.0
        %1611 = vmatprep.subr.mxu0 0.0
        %1612 = vmatpush1.xpose.msra.mxu0 0.0
        %1613 = vmatprep.subr.mxu0 0.0
        %1614 = vmatpush1.xpose.msra.mxu0 0.0
        %1615 = vmatprep.subr.mxu0 0.0
        %1616 = vmatpush1.xpose.msra.mxu0 0.0
        %1617 = vmatprep.subr.mxu0 0.0
        %1618 = vmatpush1.xpose.msra.mxu0 0.0
        %1619 = vmatprep.subr.mxu0 0.0
        %1620 = vmatpush1.xpose.msra.mxu0 0.0
        %1621 = vmatprep.subr.mxu0 0.0
        %1622 = vmatpush1.xpose.msra.mxu0 0.0
        %1623 = vmatprep.subr.mxu0 0.0
        %1624 = vmatpush1.xpose.msra.mxu0 0.0
        %1625 = vmatprep.subr.mxu0 0.0
        %1626 = vmatpush1.xpose.msra.mxu0 0.0
        %1627 = vmatprep.subr.mxu0 0.0
        %1628 = vmatpush1.xpose.msra.mxu0 0.0
        %1629 = vmatprep.subr.mxu0 0.0
        %1630 = vmatpush1.xpose.msra.mxu0 0.0
        %1631 = vmatprep.subr.mxu0 0.0
        %1632 = vmatpush1.xpose.msra.mxu0 0.0
        %1633 = vmatprep.subr.mxu0 0.0
        %1634 = vmatpush1.xpose.msra.mxu0 0.0
        %1635 = vmatprep.subr.mxu0 0.0
        %1636 = vmatpush1.xpose.msra.mxu0 0.0
        %1637 = vmatprep.subr.mxu0 0.0
        %1638 = vmatpush1.xpose.msra.mxu0 0.0
        %1639 = vmatprep.subr.mxu0 0.0
        %1640 = vmatpush1.xpose.msra.mxu0 0.0
        %1641 = vmatprep.mubr.f32.mxu0 0.0
        %1642 = vmatmul.mubr.f32.gmra.mrb[0].mxu0 %v1572
        %v1643 = vpop.f32.mrb[0].mxu0
        %v1644 = vadd.f32 %v1416, %v1643
        %v1645 = vpop.f32.mrb[0].mxu0
        %1646 = vdwg.mxu0
        %v1648 = vsel %vm1418, %v1406, 0
        %v1651 = vsel %vm1418, %v1410, 0
        %1653 = vmatprep.subr.mxu0 0.0
        %1654 = vmatpush1.xpose.msra.mxu0 %v1651
        %1655 = vmatprep.subr.mxu0 0.0
        %1656 = vmatpush1.xpose.msra.mxu0 0.0
        %1657 = vmatprep.subr.mxu0 0.0
        %1658 = vmatpush1.xpose.msra.mxu0 0.0
        %1659 = vmatprep.subr.mxu0 0.0
        %1660 = vmatpush1.xpose.msra.mxu0 0.0
        %1661 = vmatprep.subr.mxu0 0.0
        %1662 = vmatpush1.xpose.msra.mxu0 0.0
        %1663 = vmatprep.subr.mxu0 0.0
        %1664 = vmatpush1.xpose.msra.mxu0 0.0
        %1665 = vmatprep.subr.mxu0 0.0
        %1666 = vmatpush1.xpose.msra.mxu0 0.0
        %1667 = vmatprep.subr.mxu0 0.0
        %1668 = vmatpush1.xpose.msra.mxu0 0.0
        %1669 = vmatprep.subr.mxu0 0.0
        %1670 = vmatpush1.xpose.msra.mxu0 0.0
        %1671 = vmatprep.subr.mxu0 0.0
        %1672 = vmatpush1.xpose.msra.mxu0 0.0
        %1673 = vmatprep.subr.mxu0 0.0
        %1674 = vmatpush1.xpose.msra.mxu0 0.0
        %1675 = vmatprep.subr.mxu0 0.0
        %1676 = vmatpush1.xpose.msra.mxu0 0.0
        %1677 = vmatprep.subr.mxu0 0.0
        %1678 = vmatpush1.xpose.msra.mxu0 0.0
        %1679 = vmatprep.subr.mxu0 0.0
        %1680 = vmatpush1.xpose.msra.mxu0 0.0
        %1681 = vmatprep.subr.mxu0 0.0
        %1682 = vmatpush1.xpose.msra.mxu0 0.0
        %1683 = vmatprep.subr.mxu0 0.0
        %1684 = vmatpush1.xpose.msra.mxu0 0.0
        %1685 = vmatprep.subr.mxu0 0.0
        %1686 = vmatpush1.xpose.msra.mxu0 0.0
        %1687 = vmatprep.subr.mxu0 0.0
        %1688 = vmatpush1.xpose.msra.mxu0 0.0
        %1689 = vmatprep.subr.mxu0 0.0
        %1690 = vmatpush1.xpose.msra.mxu0 0.0
        %1691 = vmatprep.subr.mxu0 0.0
        %1692 = vmatpush1.xpose.msra.mxu0 0.0
        %1693 = vmatprep.subr.mxu0 0.0
        %1694 = vmatpush1.xpose.msra.mxu0 0.0
        %1695 = vmatprep.subr.mxu0 0.0
        %1696 = vmatpush1.xpose.msra.mxu0 0.0
        %1697 = vmatprep.subr.mxu0 0.0
        %1698 = vmatpush1.xpose.msra.mxu0 0.0
        %1699 = vmatprep.subr.mxu0 0.0
        %1700 = vmatpush1.xpose.msra.mxu0 0.0
        %1701 = vmatprep.subr.mxu0 0.0
        %1702 = vmatpush1.xpose.msra.mxu0 0.0
        %1703 = vmatprep.subr.mxu0 0.0
        %1704 = vmatpush1.xpose.msra.mxu0 0.0
        %1705 = vmatprep.subr.mxu0 0.0
        %1706 = vmatpush1.xpose.msra.mxu0 0.0
        %1707 = vmatprep.subr.mxu0 0.0
        %1708 = vmatpush1.xpose.msra.mxu0 0.0
        %1709 = vmatprep.subr.mxu0 0.0
        %1710 = vmatpush1.xpose.msra.mxu0 0.0
        %1711 = vmatprep.subr.mxu0 0.0
        %1712 = vmatpush1.xpose.msra.mxu0 0.0
        %1713 = vmatprep.subr.mxu0 0.0
        %1714 = vmatpush1.xpose.msra.mxu0 0.0
        %1715 = vmatprep.subr.mxu0 0.0
        %1716 = vmatpush1.xpose.msra.mxu0 0.0
        %1717 = vmatprep.mubr.f32.mxu0 0.0
        %1718 = vmatmul.mubr.f32.gmra.mrb[0].mxu0 %v1648
        %v1719 = vpop.f32.mrb[0].mxu0
        %v1720 = vadd.f32 %v1416, %v1719
        %v1721 = vpop.f32.mrb[0].mxu0
        %1722 = vdwg.mxu0
        %1723 = vst.msk [vmem:[%s668] sm:$0xff] %vm1418, %v1492
        %1724 = vst.msk [vmem:[%s668 + $0x8] sm:$0xff] %vm1418, %v1568
        %1725 = vst.msk [vmem:[%s668 + $0x10] sm:$0xff] %vm1418, %v1644
        %1726 = vst.msk [vmem:[%s668 + $0x18] sm:$0xff] %vm1418, %v1720
        %v1727 = vsel %vm1418, %v1492, -inf
        %1728 = vmax.xlane.f32.xlu0 %v1727
        %v1729 = vpop.xlane.xlu0 %1728
        %v1730 = vsel %vm1418, %v1568, -inf
        %1731 = vmax.xlane.f32.xlu0 %v1730
        %v1732 = vpop.xlane.xlu0 %1731
        %v1733 = vsel %vm1418, %v1644, -inf
        %1734 = vmax.xlane.f32.xlu0 %v1733
        %v1735 = vpop.xlane.xlu0 %1734
        %v1736 = vsel %vm1418, %v1720, -inf
        %1737 = vmax.xlane.f32.xlu0 %v1736
        %v1738 = vpop.xlane.xlu0 %1737
        %v1739 = vsub.f32 %v1492, %v1729
        %v1740 = vsub.f32 %v1568, %v1732
        %v1741 = vsub.f32 %v1644, %v1735
        %v1742 = vsub.f32 %v1720, %v1738
        %v1743 = vmul.f32 %v1739, 1.442695
        %v1744 = vpow.pop %v1743
        %v1745 = vmul.f32 %v1740, 1.442695
        %v1746 = vpow.pop %v1745
        %v1747 = vmul.f32 %v1741, 1.442695
        %v1748 = vpow.pop %v1747
        %v1749 = vmul.f32 %v1742, 1.442695
        %v1750 = vpow.pop %v1749
        %v1751 = vsel %vm1418, %v1744, 0.0
        %1752 = vadd.xlane.f32.xlu0 %v1751
        %v1753 = vpop.xlane.xlu0 %1752
        %v1754 = vsel %vm1418, %v1746, 0.0
        %1755 = vadd.xlane.f32.xlu0 %v1754
        %v1756 = vpop.xlane.xlu0 %1755
        %v1757 = vsel %vm1418, %v1748, 0.0
        %1758 = vadd.xlane.f32.xlu0 %v1757
        %v1759 = vpop.xlane.xlu0 %1758
        %v1760 = vsel %vm1418, %v1750, 0.0
        %1761 = vadd.xlane.f32.xlu0 %v1760
        %v1762 = vpop.xlane.xlu0 %1761
        %v1763 = vrcp.pop %v1753
        %v1764 = vrcp.pop %v1756
        %v1765 = vrcp.pop %v1759
        %v1766 = vrcp.pop %v1762
        %v1767 = vmul.f32 %v1744, %v1763
        %v1768 = vmul.f32 %v1746, %v1764
        %v1769 = vmul.f32 %v1748, %v1765
        %v1770 = vmul.f32 %v1750, %v1766
        %v1771 = vld [vmem:[#allocation3] sm:$0xff]
        %v1772 = vld [vmem:[#allocation3 + $0x8] sm:$0xff]
        %v1773 = vld [vmem:[#allocation3 + $0x10] sm:$0xff]
        %v1774 = vld [vmem:[#allocation3 + $0x18] sm:$0xff]
        %v1776 = vsel %vm1418, %v1767, 0
        %1778 = vmatprep.subr.mxu0 0.0
        %1779 = vmatpush1.msra.mxu0 %v1771
        %1780 = vmatprep.subr.mxu0 0.0
        %1781 = vmatpush1.msra.mxu0 0.0
        %1782 = vmatprep.subr.mxu0 0.0
        %1783 = vmatpush1.msra.mxu0 0.0
        %1784 = vmatprep.subr.mxu0 0.0
        %1785 = vmatpush1.msra.mxu0 0.0
        %1786 = vmatprep.subr.mxu0 0.0
        %1787 = vmatpush1.msra.mxu0 0.0
        %1788 = vmatprep.subr.mxu0 0.0
        %1789 = vmatpush1.msra.mxu0 0.0
        %1790 = vmatprep.subr.mxu0 0.0
        %1791 = vmatpush1.msra.mxu0 0.0
        %1792 = vmatprep.subr.mxu0 0.0
        %1793 = vmatpush1.msra.mxu0 0.0
        %1794 = vmatprep.subr.mxu0 0.0
        %1795 = vmatpush1.msra.mxu0 0.0
        %1796 = vmatprep.subr.mxu0 0.0
        %1797 = vmatpush1.msra.mxu0 0.0
        %1798 = vmatprep.subr.mxu0 0.0
        %1799 = vmatpush1.msra.mxu0 0.0
        %1800 = vmatprep.subr.mxu0 0.0
        %1801 = vmatpush1.msra.mxu0 0.0
        %1802 = vmatprep.subr.mxu0 0.0
        %1803 = vmatpush1.msra.mxu0 0.0
        %1804 = vmatprep.subr.mxu0 0.0
        %1805 = vmatpush1.msra.mxu0 0.0
        %1806 = vmatprep.subr.mxu0 0.0
        %1807 = vmatpush1.msra.mxu0 0.0
        %1808 = vmatprep.subr.mxu0 0.0
        %1809 = vmatpush1.msra.mxu0 0.0
        %1810 = vmatprep.subr.mxu0 0.0
        %1811 = vmatpush1.msra.mxu0 0.0
        %1812 = vmatprep.subr.mxu0 0.0
        %1813 = vmatpush1.msra.mxu0 0.0
        %1814 = vmatprep.subr.mxu0 0.0
        %1815 = vmatpush1.msra.mxu0 0.0
        %1816 = vmatprep.subr.mxu0 0.0
        %1817 = vmatpush1.msra.mxu0 0.0
        %1818 = vmatprep.subr.mxu0 0.0
        %1819 = vmatpush1.msra.mxu0 0.0
        %1820 = vmatprep.subr.mxu0 0.0
        %1821 = vmatpush1.msra.mxu0 0.0
        %1822 = vmatprep.subr.mxu0 0.0
        %1823 = vmatpush1.msra.mxu0 0.0
        %1824 = vmatprep.subr.mxu0 0.0
        %1825 = vmatpush1.msra.mxu0 0.0
        %1826 = vmatprep.subr.mxu0 0.0
        %1827 = vmatpush1.msra.mxu0 0.0
        %1828 = vmatprep.subr.mxu0 0.0
        %1829 = vmatpush1.msra.mxu0 0.0
        %1830 = vmatprep.subr.mxu0 0.0
        %1831 = vmatpush1.msra.mxu0 0.0
        %1832 = vmatprep.subr.mxu0 0.0
        %1833 = vmatpush1.msra.mxu0 0.0
        %1834 = vmatprep.subr.mxu0 0.0
        %1835 = vmatpush1.msra.mxu0 0.0
        %1836 = vmatprep.subr.mxu0 0.0
        %1837 = vmatpush1.msra.mxu0 0.0
        %1838 = vmatprep.subr.mxu0 0.0
        %1839 = vmatpush1.msra.mxu0 0.0
        %1840 = vmatprep.subr.mxu0 0.0
        %1841 = vmatpush1.msra.mxu0 0.0
        %1842 = vmatprep.mubr.f32.mxu0 0.0
        %1843 = vmatmul.mubr.f32.gmra.mrb[0].mxu0 %v1776
        %v1844 = vpop.f32.mrb[0].mxu0
        %v1845 = vadd.f32 0.0, %v1844
        %v1846 = vpop.f32.mrb[0].mxu0
        %1847 = vdwg.mxu0
        %v1849 = vsel %vm1418, %v1768, 0
        %1851 = vmatprep.subr.mxu0 0.0
        %1852 = vmatpush1.msra.mxu0 %v1772
        %1853 = vmatprep.subr.mxu0 0.0
        %1854 = vmatpush1.msra.mxu0 0.0
        %1855 = vmatprep.subr.mxu0 0.0
        %1856 = vmatpush1.msra.mxu0 0.0
        %1857 = vmatprep.subr.mxu0 0.0
        %1858 = vmatpush1.msra.mxu0 0.0
        %1859 = vmatprep.subr.mxu0 0.0
        %1860 = vmatpush1.msra.mxu0 0.0
        %1861 = vmatprep.subr.mxu0 0.0
        %1862 = vmatpush1.msra.mxu0 0.0
        %1863 = vmatprep.subr.mxu0 0.0
        %1864 = vmatpush1.msra.mxu0 0.0
        %1865 = vmatprep.subr.mxu0 0.0
        %1866 = vmatpush1.msra.mxu0 0.0
        %1867 = vmatprep.subr.mxu0 0.0
        %1868 = vmatpush1.msra.mxu0 0.0
        %1869 = vmatprep.subr.mxu0 0.0
        %1870 = vmatpush1.msra.mxu0 0.0
        %1871 = vmatprep.subr.mxu0 0.0
        %1872 = vmatpush1.msra.mxu0 0.0
        %1873 = vmatprep.subr.mxu0 0.0
        %1874 = vmatpush1.msra.mxu0 0.0
        %1875 = vmatprep.subr.mxu0 0.0
        %1876 = vmatpush1.msra.mxu0 0.0
        %1877 = vmatprep.subr.mxu0 0.0
        %1878 = vmatpush1.msra.mxu0 0.0
        %1879 = vmatprep.subr.mxu0 0.0
        %1880 = vmatpush1.msra.mxu0 0.0
        %1881 = vmatprep.subr.mxu0 0.0
        %1882 = vmatpush1.msra.mxu0 0.0
        %1883 = vmatprep.subr.mxu0 0.0
        %1884 = vmatpush1.msra.mxu0 0.0
        %1885 = vmatprep.subr.mxu0 0.0
        %1886 = vmatpush1.msra.mxu0 0.0
        %1887 = vmatprep.subr.mxu0 0.0
        %1888 = vmatpush1.msra.mxu0 0.0
        %1889 = vmatprep.subr.mxu0 0.0
        %1890 = vmatpush1.msra.mxu0 0.0
        %1891 = vmatprep.subr.mxu0 0.0
        %1892 = vmatpush1.msra.mxu0 0.0
        %1893 = vmatprep.subr.mxu0 0.0
        %1894 = vmatpush1.msra.mxu0 0.0
        %1895 = vmatprep.subr.mxu0 0.0
        %1896 = vmatpush1.msra.mxu0 0.0
        %1897 = vmatprep.subr.mxu0 0.0
        %1898 = vmatpush1.msra.mxu0 0.0
        %1899 = vmatprep.subr.mxu0 0.0
        %1900 = vmatpush1.msra.mxu0 0.0
        %1901 = vmatprep.subr.mxu0 0.0
        %1902 = vmatpush1.msra.mxu0 0.0
        %1903 = vmatprep.subr.mxu0 0.0
        %1904 = vmatpush1.msra.mxu0 0.0
        %1905 = vmatprep.subr.mxu0 0.0
        %1906 = vmatpush1.msra.mxu0 0.0
        %1907 = vmatprep.subr.mxu0 0.0
        %1908 = vmatpush1.msra.mxu0 0.0
        %1909 = vmatprep.subr.mxu0 0.0
        %1910 = vmatpush1.msra.mxu0 0.0
        %1911 = vmatprep.subr.mxu0 0.0
        %1912 = vmatpush1.msra.mxu0 0.0
        %1913 = vmatprep.subr.mxu0 0.0
        %1914 = vmatpush1.msra.mxu0 0.0
        %1915 = vmatprep.mubr.f32.mxu0 0.0
        %1916 = vmatmul.mubr.f32.gmra.mrb[0].mxu0 %v1849
        %v1917 = vpop.f32.mrb[0].mxu0
        %v1918 = vadd.f32 0.0, %v1917
        %v1919 = vpop.f32.mrb[0].mxu0
        %1920 = vdwg.mxu0
        %v1922 = vsel %vm1418, %v1769, 0
        %1924 = vmatprep.subr.mxu0 0.0
        %1925 = vmatpush1.msra.mxu0 %v1773
        %1926 = vmatprep.subr.mxu0 0.0
        %1927 = vmatpush1.msra.mxu0 0.0
        %1928 = vmatprep.subr.mxu0 0.0
        %1929 = vmatpush1.msra.mxu0 0.0
        %1930 = vmatprep.subr.mxu0 0.0
        %1931 = vmatpush1.msra.mxu0 0.0
        %1932 = vmatprep.subr.mxu0 0.0
        %1933 = vmatpush1.msra.mxu0 0.0
        %1934 = vmatprep.subr.mxu0 0.0
        %1935 = vmatpush1.msra.mxu0 0.0
        %1936 = vmatprep.subr.mxu0 0.0
        %1937 = vmatpush1.msra.mxu0 0.0
        %1938 = vmatprep.subr.mxu0 0.0
        %1939 = vmatpush1.msra.mxu0 0.0
        %1940 = vmatprep.subr.mxu0 0.0
        %1941 = vmatpush1.msra.mxu0 0.0
        %1942 = vmatprep.subr.mxu0 0.0
        %1943 = vmatpush1.msra.mxu0 0.0
        %1944 = vmatprep.subr.mxu0 0.0
        %1945 = vmatpush1.msra.mxu0 0.0
        %1946 = vmatprep.subr.mxu0 0.0
        %1947 = vmatpush1.msra.mxu0 0.0
        %1948 = vmatprep.subr.mxu0 0.0
        %1949 = vmatpush1.msra.mxu0 0.0
        %1950 = vmatprep.subr.mxu0 0.0
        %1951 = vmatpush1.msra.mxu0 0.0
        %1952 = vmatprep.subr.mxu0 0.0
        %1953 = vmatpush1.msra.mxu0 0.0
        %1954 = vmatprep.subr.mxu0 0.0
        %1955 = vmatpush1.msra.mxu0 0.0
        %1956 = vmatprep.subr.mxu0 0.0
        %1957 = vmatpush1.msra.mxu0 0.0
        %1958 = vmatprep.subr.mxu0 0.0
        %1959 = vmatpush1.msra.mxu0 0.0
        %1960 = vmatprep.subr.mxu0 0.0
        %1961 = vmatpush1.msra.mxu0 0.0
        %1962 = vmatprep.subr.mxu0 0.0
        %1963 = vmatpush1.msra.mxu0 0.0
        %1964 = vmatprep.subr.mxu0 0.0
        %1965 = vmatpush1.msra.mxu0 0.0
        %1966 = vmatprep.subr.mxu0 0.0
        %1967 = vmatpush1.msra.mxu0 0.0
        %1968 = vmatprep.subr.mxu0 0.0
        %1969 = vmatpush1.msra.mxu0 0.0
        %1970 = vmatprep.subr.mxu0 0.0
        %1971 = vmatpush1.msra.mxu0 0.0
        %1972 = vmatprep.subr.mxu0 0.0
        %1973 = vmatpush1.msra.mxu0 0.0
        %1974 = vmatprep.subr.mxu0 0.0
        %1975 = vmatpush1.msra.mxu0 0.0
        %1976 = vmatprep.subr.mxu0 0.0
        %1977 = vmatpush1.msra.mxu0 0.0
        %1978 = vmatprep.subr.mxu0 0.0
        %1979 = vmatpush1.msra.mxu0 0.0
        %1980 = vmatprep.subr.mxu0 0.0
        %1981 = vmatpush1.msra.mxu0 0.0
        %1982 = vmatprep.subr.mxu0 0.0
        %1983 = vmatpush1.msra.mxu0 0.0
        %1984 = vmatprep.subr.mxu0 0.0
        %1985 = vmatpush1.msra.mxu0 0.0
        %1986 = vmatprep.subr.mxu0 0.0
        %1987 = vmatpush1.msra.mxu0 0.0
        %1988 = vmatprep.mubr.f32.mxu0 0.0
        %1989 = vmatmul.mubr.f32.gmra.mrb[0].mxu0 %v1922
        %v1990 = vpop.f32.mrb[0].mxu0
        %v1991 = vadd.f32 0.0, %v1990
        %v1992 = vpop.f32.mrb[0].mxu0
        %1993 = vdwg.mxu0
        %v1995 = vsel %vm1418, %v1770, 0
        %1997 = vmatprep.subr.mxu0 0.0
        %1998 = vmatpush1.msra.mxu0 %v1774
        %1999 = vmatprep.subr.mxu0 0.0
        %2000 = vmatpush1.msra.mxu0 0.0
        %2001 = vmatprep.subr.mxu0 0.0
        %2002 = vmatpush1.msra.mxu0 0.0
        %2003 = vmatprep.subr.mxu0 0.0
        %2004 = vmatpush1.msra.mxu0 0.0
        %2005 = vmatprep.subr.mxu0 0.0
        %2006 = vmatpush1.msra.mxu0 0.0
        %2007 = vmatprep.subr.mxu0 0.0
        %2008 = vmatpush1.msra.mxu0 0.0
        %2009 = vmatprep.subr.mxu0 0.0
        %2010 = vmatpush1.msra.mxu0 0.0
        %2011 = vmatprep.subr.mxu0 0.0
        %2012 = vmatpush1.msra.mxu0 0.0
        %2013 = vmatprep.subr.mxu0 0.0
        %2014 = vmatpush1.msra.mxu0 0.0
        %2015 = vmatprep.subr.mxu0 0.0
        %2016 = vmatpush1.msra.mxu0 0.0
        %2017 = vmatprep.subr.mxu0 0.0
        %2018 = vmatpush1.msra.mxu0 0.0
        %2019 = vmatprep.subr.mxu0 0.0
        %2020 = vmatpush1.msra.mxu0 0.0
        %2021 = vmatprep.subr.mxu0 0.0
        %2022 = vmatpush1.msra.mxu0 0.0
        %2023 = vmatprep.subr.mxu0 0.0
        %2024 = vmatpush1.msra.mxu0 0.0
        %2025 = vmatprep.subr.mxu0 0.0
        %2026 = vmatpush1.msra.mxu0 0.0
        %2027 = vmatprep.subr.mxu0 0.0
        %2028 = vmatpush1.msra.mxu0 0.0
        %2029 = vmatprep.subr.mxu0 0.0
        %2030 = vmatpush1.msra.mxu0 0.0
        %2031 = vmatprep.subr.mxu0 0.0
        %2032 = vmatpush1.msra.mxu0 0.0
        %2033 = vmatprep.subr.mxu0 0.0
        %2034 = vmatpush1.msra.mxu0 0.0
        %2035 = vmatprep.subr.mxu0 0.0
        %2036 = vmatpush1.msra.mxu0 0.0
        %2037 = vmatprep.subr.mxu0 0.0
        %2038 = vmatpush1.msra.mxu0 0.0
        %2039 = vmatprep.subr.mxu0 0.0
        %2040 = vmatpush1.msra.mxu0 0.0
        %2041 = vmatprep.subr.mxu0 0.0
        %2042 = vmatpush1.msra.mxu0 0.0
        %2043 = vmatprep.subr.mxu0 0.0
        %2044 = vmatpush1.msra.mxu0 0.0
        %2045 = vmatprep.subr.mxu0 0.0
        %2046 = vmatpush1.msra.mxu0 0.0
        %2047 = vmatprep.subr.mxu0 0.0
        %2048 = vmatpush1.msra.mxu0 0.0
        %2049 = vmatprep.subr.mxu0 0.0
        %2050 = vmatpush1.msra.mxu0 0.0
        %2051 = vmatprep.subr.mxu0 0.0
        %2052 = vmatpush1.msra.mxu0 0.0
        %2053 = vmatprep.subr.mxu0 0.0
        %2054 = vmatpush1.msra.mxu0 0.0
        %2055 = vmatprep.subr.mxu0 0.0
        %2056 = vmatpush1.msra.mxu0 0.0
        %2057 = vmatprep.subr.mxu0 0.0
        %2058 = vmatpush1.msra.mxu0 0.0
        %2059 = vmatprep.subr.mxu0 0.0
        %2060 = vmatpush1.msra.mxu0 0.0
        %2061 = vmatprep.mubr.f32.mxu0 0.0
        %2062 = vmatmul.mubr.f32.gmra.mrb[0].mxu0 %v1995
        %v2063 = vpop.f32.mrb[0].mxu0
        %v2064 = vadd.f32 0.0, %v2063
        %v2065 = vpop.f32.mrb[0].mxu0
        %2066 = vdwg.mxu0
        %v2067 = vcombine.low %v1845, %v1991
        %v2068 = vcombine.high %v1845, %v1991
        %v2070 = vunpack.c.l.s4 1983009808
        %v2071 = vunpack.c.0.s8 %v2070
        %v2072 = vlaneseq
        %v2073 = vshrl.u32 %v2072, 7
        %v2074 = vsub.s32 %v2071, %v2073
        %v2075 = vrot.slane %v2067, %v2074
        %v2077 = vunpack.c.l.s4 1983009808
        %v2078 = vunpack.c.0.s8 %v2077
        %v2079 = vlaneseq
        %v2080 = vshrl.u32 %v2079, 7
        %v2081 = vsub.s32 %v2078, %v2080
        %v2082 = vrot.slane %v2068, %v2081
        %v2083 = vcombine.low %v1918, %v2064
        %v2084 = vcombine.high %v1918, %v2064
        %v2086 = vunpack.c.l.s4 1983009808
        %v2087 = vunpack.c.0.s8 %v2086
        %v2088 = vlaneseq
        %v2089 = vshrl.u32 %v2088, 7
        %v2090 = vsub.s32 %v2087, %v2089
        %v2091 = vrot.slane %v2083, %v2090
        %v2093 = vunpack.c.l.s4 1983009808
        %v2094 = vunpack.c.0.s8 %v2093
        %v2095 = vlaneseq
        %v2096 = vshrl.u32 %v2095, 7
        %v2097 = vsub.s32 %v2094, %v2096
        %v2098 = vrot.slane %v2084, %v2097
        %v2099 = vcombine.low %v2075, %v2091
        %v2100 = vcombine.high %v2075, %v2091
        %v2102 = vunpack.c.l.s4 1934713408
        %v2103 = vunpack.c.0.s8 %v2102
        %v2104 = vlaneseq
        %v2105 = vshrl.u32 %v2104, 7
        %v2106 = vsub.s32 %v2103, %v2105
        %v2107 = vrot.slane %v2099, %v2106
        %v2109 = vunpack.c.l.s4 1934713408
        %v2110 = vunpack.c.0.s8 %v2109
        %v2111 = vlaneseq
        %v2112 = vshrl.u32 %v2111, 7
        %v2113 = vsub.s32 %v2110, %v2112
        %v2114 = vrot.slane %v2100, %v2113
        %v2115 = vcombine.low %v2082, %v2098
        %v2116 = vcombine.high %v2082, %v2098
        %v2118 = vunpack.c.l.s4 1934713408
        %v2119 = vunpack.c.0.s8 %v2118
        %v2120 = vlaneseq
        %v2121 = vshrl.u32 %v2120, 7
        %v2122 = vsub.s32 %v2119, %v2121
        %v2123 = vrot.slane %v2115, %v2122
        %v2125 = vunpack.c.l.s4 1934713408
        %v2126 = vunpack.c.0.s8 %v2125
        %v2127 = vlaneseq
        %v2128 = vshrl.u32 %v2127, 7
        %v2129 = vsub.s32 %v2126, %v2128
        %v2130 = vrot.slane %v2116, %v2129
        %v2131 = vcombine.high %v2107, 0.0
        %v2132 = vcombine.high %v2114, 0.0
        %v2133 = vcombine.high %v2123, 0.0
        %v2134 = vcombine.high %v2130, 0.0
        %v2135 = vcombine.low %v2107, %v2114
        %v2137 = vunpack.c.l.s4 1983009808
        %v2138 = vunpack.c.0.s8 %v2137
        %v2139 = vlaneseq
        %v2140 = vshrl.u32 %v2139, 7
        %v2141 = vsub.s32 %v2138, %v2140
        %v2142 = vrot.slane %v2135, %v2141
        %v2143 = vcombine.low %v2131, %v2132
        %v2145 = vunpack.c.l.s4 1983009808
        %v2146 = vunpack.c.0.s8 %v2145
        %v2147 = vlaneseq
        %v2148 = vshrl.u32 %v2147, 7
        %v2149 = vsub.s32 %v2146, %v2148
        %v2150 = vrot.slane %v2143, %v2149
        %v2151 = vcombine.low %v2123, %v2130
        %v2153 = vunpack.c.l.s4 1983009808
        %v2154 = vunpack.c.0.s8 %v2153
        %v2155 = vlaneseq
        %v2156 = vshrl.u32 %v2155, 7
        %v2157 = vsub.s32 %v2154, %v2156
        %v2158 = vrot.slane %v2151, %v2157
        %v2159 = vcombine.low %v2133, %v2134
        %v2161 = vunpack.c.l.s4 1983009808
        %v2162 = vunpack.c.0.s8 %v2161
        %v2163 = vlaneseq
        %v2164 = vshrl.u32 %v2163, 7
        %v2165 = vsub.s32 %v2162, %v2164
        %v2166 = vrot.slane %v2159, %v2165
        %v2167 = vcombine.low %v2142, %v2150
        %v2168 = vcombine.high %v2142, %v2150
        %v2170 = vunpack.c.l.s4 1934713408
        %v2171 = vunpack.c.0.s8 %v2170
        %v2172 = vlaneseq
        %v2173 = vshrl.u32 %v2172, 7
        %v2174 = vsub.s32 %v2171, %v2173
        %v2175 = vrot.slane %v2167, %v2174
        %v2177 = vunpack.c.l.s4 1934713408
        %v2178 = vunpack.c.0.s8 %v2177
        %v2179 = vlaneseq
        %v2180 = vshrl.u32 %v2179, 7
        %v2181 = vsub.s32 %v2178, %v2180
        %v2182 = vrot.slane %v2168, %v2181
        %v2183 = vcombine.low %v2158, %v2166
        %v2184 = vcombine.high %v2158, %v2166
        %v2186 = vunpack.c.l.s4 1934713408
        %v2187 = vunpack.c.0.s8 %v2186
        %v2188 = vlaneseq
        %v2189 = vshrl.u32 %v2188, 7
        %v2190 = vsub.s32 %v2187, %v2189
        %v2191 = vrot.slane %v2183, %v2190
        %v2193 = vunpack.c.l.s4 1934713408
        %v2194 = vunpack.c.0.s8 %v2193
        %v2195 = vlaneseq
        %v2196 = vshrl.u32 %v2195, 7
        %v2197 = vsub.s32 %v2194, %v2196
        %v2198 = vrot.slane %v2184, %v2197
        %v2199 = vcombine.low %v2175, %v2191
        %v2200 = vcombine.high %v2175, %v2191
        %v2201 = vcombine.low %v2182, %v2198
        %v2202 = vcombine.high %v2182, %v2198
        %2204 = vrot.lane.b32.xlu0 %v2200, 8
        %v2205 = vpop.permute.xlu0 %2204
        %2208 = vrot.lane.b32.xlu0 %v2201, 16
        %v2209 = vpop.permute.xlu0 %2208
        %2212 = vrot.lane.b32.xlu0 %v2202, 24
        %v2213 = vpop.permute.xlu0 %2212
        %v2215 = vsel %vm1418, %v2199, %v2205
        %vm2216 = vcmask 130048
        %v2217 = vsel %vm2216, %v2215, %v2209
        %vm2218 = vcmask 195584
        %v2219 = vsel %vm2218, %v2217, %v2213
        %v2220 = vld [vmem:[%s10] sm:$0xff]
        %v2221 = vld [vmem:[%s10 + $0x8] sm:$0xff]
        %v2222 = vld [vmem:[%s10 + $0x10] sm:$0xff]
        %v2223 = vld [vmem:[%s10 + $0x18] sm:$0xff]
        %v2224 = vld [vmem:[%s11] sm:$0x1]
        %v2226 = vlaneseq
        %v2227 = vshrl.u32 %v2226, 7
        %v2228 = vsub.s32 0, %v2227
        %v2229 = vrot.slane %v2224, %v2228
        %v2232 = vsel %vm1187, %v2219, 0
        %2234 = vmatprep.subr.mxu0 0.0
        %2235 = vmatpush1.msra.mxu0 %v2220
        %2236 = vmatprep.subr.mxu0 0.0
        %2237 = vmatpush1.msra.mxu0 %v2221
        %2238 = vmatprep.subr.mxu0 0.0
        %2239 = vmatpush1.msra.mxu0 %v2222
        %2240 = vmatprep.subr.mxu0 0.0
        %2241 = vmatpush1.msra.mxu0 %v2223
        %2242 = vmatprep.subr.mxu0 0.0
        %2243 = vmatpush1.msra.mxu0 0.0
        %2244 = vmatprep.subr.mxu0 0.0
        %2245 = vmatpush1.msra.mxu0 0.0
        %2246 = vmatprep.subr.mxu0 0.0
        %2247 = vmatpush1.msra.mxu0 0.0
        %2248 = vmatprep.subr.mxu0 0.0
        %2249 = vmatpush1.msra.mxu0 0.0
        %2250 = vmatprep.subr.mxu0 0.0
        %2251 = vmatpush1.msra.mxu0 0.0
        %2252 = vmatprep.subr.mxu0 0.0
        %2253 = vmatpush1.msra.mxu0 0.0
        %2254 = vmatprep.subr.mxu0 0.0
        %2255 = vmatpush1.msra.mxu0 0.0
        %2256 = vmatprep.subr.mxu0 0.0
        %2257 = vmatpush1.msra.mxu0 0.0
        %2258 = vmatprep.subr.mxu0 0.0
        %2259 = vmatpush1.msra.mxu0 0.0
        %2260 = vmatprep.subr.mxu0 0.0
        %2261 = vmatpush1.msra.mxu0 0.0
        %2262 = vmatprep.subr.mxu0 0.0
        %2263 = vmatpush1.msra.mxu0 0.0
        %2264 = vmatprep.subr.mxu0 0.0
        %2265 = vmatpush1.msra.mxu0 0.0
        %2266 = vmatprep.subr.mxu0 0.0
        %2267 = vmatpush1.msra.mxu0 0.0
        %2268 = vmatprep.subr.mxu0 0.0
        %2269 = vmatpush1.msra.mxu0 0.0
        %2270 = vmatprep.subr.mxu0 0.0
        %2271 = vmatpush1.msra.mxu0 0.0
        %2272 = vmatprep.subr.mxu0 0.0
        %2273 = vmatpush1.msra.mxu0 0.0
        %2274 = vmatprep.subr.mxu0 0.0
        %2275 = vmatpush1.msra.mxu0 0.0
        %2276 = vmatprep.subr.mxu0 0.0
        %2277 = vmatpush1.msra.mxu0 0.0
        %2278 = vmatprep.subr.mxu0 0.0
        %2279 = vmatpush1.msra.mxu0 0.0
        %2280 = vmatprep.subr.mxu0 0.0
        %2281 = vmatpush1.msra.mxu0 0.0
        %2282 = vmatprep.subr.mxu0 0.0
        %2283 = vmatpush1.msra.mxu0 0.0
        %2284 = vmatprep.subr.mxu0 0.0
        %2285 = vmatpush1.msra.mxu0 0.0
        %2286 = vmatprep.subr.mxu0 0.0
        %2287 = vmatpush1.msra.mxu0 0.0
        %2288 = vmatprep.subr.mxu0 0.0
        %2289 = vmatpush1.msra.mxu0 0.0
        %2290 = vmatprep.subr.mxu0 0.0
        %2291 = vmatpush1.msra.mxu0 0.0
        %2292 = vmatprep.subr.mxu0 0.0
        %2293 = vmatpush1.msra.mxu0 0.0
        %2294 = vmatprep.subr.mxu0 0.0
        %2295 = vmatpush1.msra.mxu0 0.0
        %2296 = vmatprep.subr.mxu0 0.0
        %2297 = vmatpush1.msra.mxu0 0.0
        %2298 = vmatprep.mubr.f32.mxu0 0.0
        %2299 = vmatmul.mubr.f32.gmra.mrb[0].mxu0 %v2232
        %v2300 = vpop.f32.mrb[0].mxu0
        %v2301 = vadd.f32 %v2229, %v2300
        %v2302 = vpop.f32.mrb[0].mxu0
        %2303 = vdwg.mxu0
        %2304 = vst.msk [vmem:[%s661] sm:$0xff] %vm1187, %v2301
        %s2305 = sand.u32 %s340, 1
        %s2306 = scalar_lea.sflag [#allocation7], %s2305
        %s2307 = sand.u32 %s340, 1
        %s2308 = smul.addr %s2307, 8
        %s2309 = scalar_lea.vmem [#allocation16], %s2308
        %s2310 = sand.u32 %s44, 1
        %s2311 = scalar_lea.sflag [#allocation18], %s2310
        %s2312 = sand.u32 %s368, 1
        %s2313 = smul.addr %s2312, 32
        %s2314 = scalar_lea.vmem [#allocation17], %s2313
        %s2315 = sand.u32 %s44, 1
        %s2316 = scalar_lea.sflag [#allocation18], %s2315
        %s2317 = sand.u32 %s394, 1
        %s2318 = smul.addr %s2317, 32
        %s2319 = scalar_lea.vmem [#allocation19], %s2318
        %s2320 = sand.u32 %s420, 1
        %s2321 = scalar_lea.sflag [#allocation21], %s2320
        %s2322 = sand.u32 %s420, 1
        %s2323 = smul.addr %s2322, 32
        %s2324 = scalar_lea.vmem [#allocation20], %s2323
        // Predicated region
        $region97: #{tpu_custom_call.1} parent=67 // pred_check
          %p2325 = pneg %p350
        $region98: #{tpu_custom_call.1} parent=67 // pred_check_branch
          %2327 = sbr.rel (%p2325) target = $region100
        $region99: #{tpu_custom_call.1} parent=67 // pred_region
          %s2329 = ssub.s32 128, 128
          %2330 = vsyncadd %s2306, %s2329
          %s2331 = sadd.s32 %s49, %s48
          %s2332 = smul.addr %s2331, 128
          %s2333 = scalar_lea.hbm %s12, %s2332
          %s2335 = sshll.u32 %s2309, 4
          %s2336 = int_to_ptr.vmem [resolvable:$true] %s2335
          %2338 = dma.vmem_to_hbm [thread:$0]  %s2336, 128, %s2333, %s2306
        $region100: #{tpu_custom_call.1} parent=67 // pred_fallthru
          _
        // Predicated region
        $region101: #{tpu_custom_call.1} parent=67 // pred_check
          %p2339 = pneg %p378
        $region102: #{tpu_custom_call.1} parent=67 // pred_check_branch
          %2341 = sbr.rel (%p2339) target = $region104
        $region103: #{tpu_custom_call.1} parent=67 // pred_region
          %s2343 = ssub.s32 512, 512
          %2344 = vsyncadd %s2311, %s2343
          %s2345 = smul.addr %s48, 4
          %s2346 = sadd.s32 %s49, %s2345
          %s2347 = smul.addr %s2346, 128
          %s2348 = scalar_lea.hbm %s13, %s2347
          %s2349 = sshll.u32 %s2314, 4
          %s2350 = int_to_ptr.vmem [resolvable:$true] %s2349
          %2355 = dma.vmem_to_hbm [thread:$0]  %s2350, 512, %s2348, %s2311, 128, 128, 8
        $region104: #{tpu_custom_call.1} parent=67 // pred_fallthru
          _
        // Predicated region
        $region105: #{tpu_custom_call.1} parent=67 // pred_check
          %p2356 = pneg %p404
        $region106: #{tpu_custom_call.1} parent=67 // pred_check_branch
          %2358 = sbr.rel (%p2356) target = $region108
        $region107: #{tpu_custom_call.1} parent=67 // pred_region
          %s2360 = ssub.s32 512, 512
          %2361 = vsyncadd %s2316, %s2360
          %s2362 = smul.addr %s48, 4
          %s2363 = smul.addr %s2362, 128
          %s2364 = scalar_lea.hbm %s14, %s2363
          %s2365 = sshll.u32 %s2319, 4
          %s2366 = int_to_ptr.vmem [resolvable:$true] %s2365
          %2371 = dma.vmem_to_hbm [thread:$0]  %s2366, 512, %s2364, %s2316, 128, 128, 8
        $region108: #{tpu_custom_call.1} parent=67 // pred_fallthru
          _
        // Predicated region
        $region109: #{tpu_custom_call.1} parent=67 // pred_check
          %p2372 = pneg %p430
        $region110: #{tpu_custom_call.1} parent=67 // pred_check_branch
          %2374 = sbr.rel (%p2372) target = $region112
        $region111: #{tpu_custom_call.1} parent=67 // pred_region
          %s2376 = ssub.s32 512, 512
          %2377 = vsyncadd %s2321, %s2376
          %s2378 = smul.addr %s48, 4
          %s2379 = smul.addr %s2378, 128
          %s2380 = scalar_lea.hbm %s15, %s2379
          %s2381 = sshll.u32 %s2324, 4
          %s2382 = int_to_ptr.vmem [resolvable:$true] %s2381
          %2387 = dma.vmem_to_hbm [thread:$0]  %s2382, 512, %s2380, %s2321, 128, 128, 8
        $region112: #{tpu_custom_call.1} parent=67 // pred_fallthru
          _
      $region68: #{tpu_custom_call.1} parent=5 // pred_fallthru
        _
      %p2388 = scmp.le.s32.totalorder 2, %s39
      // Predicated region
      $region113: #{tpu_custom_call.1} parent=5 // pred_check
        %p2389 = pneg %p2388
      $region114: #{tpu_custom_call.1} parent=5 // pred_check_branch
        %2391 = sbr.rel (%p2389) target = $region116
      $region115: #{tpu_custom_call.1} parent=5 // pred_region
        %s2392 = ssub.s32 %s39, 2
        // Predicated region
        $region117: #{tpu_custom_call.1} parent=115 // pred_check
          %p2393 = pneg %p356
        $region118: #{tpu_custom_call.1} parent=115 // pred_check_branch
          %2395 = sbr.rel (%p2393) target = $region120
        $region119: #{tpu_custom_call.1} parent=115 // pred_region
          %s2396 = sand.u32 %s341, 1
          %s2397 = scalar_lea.sflag [#allocation7], %s2396
          %s2398 = sand.u32 %s341, 1
          %s2399 = smul.addr %s2398, 8
          %s2400 = scalar_lea.vmem [#allocation16], %s2399
          %2401 = dma.done %s2397, 128
        $region120: #{tpu_custom_call.1} parent=115 // pred_fallthru
          _
        // Predicated region
        $region121: #{tpu_custom_call.1} parent=115 // pred_check
          %p2402 = pneg %p384
        $region122: #{tpu_custom_call.1} parent=115 // pred_check_branch
          %2404 = sbr.rel (%p2402) target = $region124
        $region123: #{tpu_custom_call.1} parent=115 // pred_region
          %s2405 = sand.u32 %s45, 1
          %s2406 = scalar_lea.sflag [#allocation18], %s2405
          %s2407 = sand.u32 %s369, 1
          %s2408 = smul.addr %s2407, 32
          %s2409 = scalar_lea.vmem [#allocation17], %s2408
          %2410 = dma.done %s2406, 512
        $region124: #{tpu_custom_call.1} parent=115 // pred_fallthru
          _
        // Predicated region
        $region125: #{tpu_custom_call.1} parent=115 // pred_check
          %p2411 = pneg %p410
        $region126: #{tpu_custom_call.1} parent=115 // pred_check_branch
          %2413 = sbr.rel (%p2411) target = $region128
        $region127: #{tpu_custom_call.1} parent=115 // pred_region
          %s2414 = sand.u32 %s45, 1
          %s2415 = scalar_lea.sflag [#allocation18], %s2414
          %s2416 = sand.u32 %s395, 1
          %s2417 = smul.addr %s2416, 32
          %s2418 = scalar_lea.vmem [#allocation19], %s2417
          %2419 = dma.done %s2415, 512
        $region128: #{tpu_custom_call.1} parent=115 // pred_fallthru
          _
        // Predicated region
        $region129: #{tpu_custom_call.1} parent=115 // pred_check
          %p2420 = pneg %p436
        $region130: #{tpu_custom_call.1} parent=115 // pred_check_branch
          %2422 = sbr.rel (%p2420) target = $region132
        $region131: #{tpu_custom_call.1} parent=115 // pred_region
          %s2423 = sand.u32 %s421, 1
          %s2424 = scalar_lea.sflag [#allocation21], %s2423
          %s2425 = sand.u32 %s421, 1
          %s2426 = smul.addr %s2425, 32
          %s2427 = scalar_lea.vmem [#allocation20], %s2426
          %2428 = dma.done %s2424, 512
        $region132: #{tpu_custom_call.1} parent=115 // pred_fallthru
          _
      $region116: #{tpu_custom_call.1} parent=5 // pred_fallthru
        _
    $region6: #{tpu_custom_call.1} parent=1 // loop_footer
      %s43 = sadd.s32 1, %s39
    $region7: #{tpu_custom_call.1} parent=1 // loop_footer_branch
      %38 = sbr.rel target = $region3
    $region8: #{tpu_custom_call.1} parent=1 // loop_exit
      _
    %2429 = vsyncpa [#allocation6], 1
    %s2430 = scalar_lea.sflag [#allocation6], 1
    %2431 = vsyncpa %s2430, 1
    %2432 = vsyncpa [#allocation9], 1
    %s2433 = scalar_lea.sflag [#allocation9], 1
    %2434 = vsyncpa %s2433, 1
    %2435 = vsyncpa [#allocation12], 1
    %2436 = vsyncpa [#allocation15], 1
    %2437 = vsyncpa [#allocation7], 1
    %s2438 = scalar_lea.sflag [#allocation7], 1
    %2439 = vsyncpa %s2438, 1
    %2440 = vsyncpa [#allocation18], 1
    %s2441 = scalar_lea.sflag [#allocation18], 1
    %2442 = vsyncpa %s2441, 1
    %2443 = vsyncpa [#allocation21], 1
    %s2444 = scalar_lea.sflag [#allocation21], 1
    %2445 = vsyncpa %s2444, 1

</llo_original>
